<compile_context>
chip_gen: v5e
topology: v5e:2x2
jax: 0.10.0
libtpu: 0.0.40
codegen_flags: <defaults>
</compile_context>

<pallas_src>
import functools
import math

import jax
import jax.numpy as jnp
from jax import lax
from jax.experimental import pallas as pl
from jax.experimental.pallas import tpu as pltpu

BN_EPS = 1e-5


# ------------------------------ fused kernel ---------------------------------

def _sepconv_kernel(x_ref, dw_ref, scale_ref, shift_ref, pw_ref, pwb_ref, out_ref,
                    *, K, pad, H, W, H_out, W_out, has_pw_bias):
    """Fused depthwise KxK conv (stride 1) + BN affine + pointwise 1x1 conv.

    x_ref:     (1, H, W, Cin)        one batch element (NHWC block)
    dw_ref:    (K*K, Cin)            depthwise taps, tap-major
    scale_ref: (1, Cin)              BN scale  = gamma / sqrt(var + eps)
    shift_ref: (1, Cin)              BN shift  (depthwise bias already folded in)
    pw_ref:    (Cin, Cout)           pointwise weights (bf16 or f32)
    pwb_ref:   (1, Cout)             pointwise bias (ignored if has_pw_bias=False)
    out_ref:   (1, H_out, W_out, Cout)
    """
    Cin = x_ref.shape[-1]
    Cout = out_ref.shape[-1]

    x = x_ref[0].astype(jnp.float32)           # (H, W, Cin): W=sublanes, Cin=lanes
    dw = dw_ref[...].astype(jnp.float32)       # (K*K, Cin)

    # column index, varies along the sublane (W) axis; used to mask rolled wraps
    col = lax.broadcasted_iota(jnp.int32, (1, W, Cin), 1)

    acc = jnp.zeros((H_out, W, Cin), jnp.float32)
    for dy in range(K):
        oy = dy - pad
        # H shift: pick source rows [oy, oy + H_out) with zero rows where OOB.
        # H is the outer dim -> slices / concats here are cheap vreg placement.
        lo = max(0, oy)
        hi = min(H, oy + H_out)
        if hi <= lo:
            xs = jnp.zeros((H_out, W, Cin), jnp.float32)
        else:
            top = lo - oy
            bot = (oy + H_out) - hi
            parts = []
            if top > 0:
                parts.append(jnp.zeros((top, W, Cin), jnp.float32))
            parts.append(x[lo:hi])
            if bot > 0:
                parts.append(jnp.zeros((bot, W, Cin), jnp.float32))
            xs = parts[0] if len(parts) == 1 else jnp.concatenate(parts, axis=0)

        for dx in range(K):
            ox = dx - pad
            tap = dw[dy * K + dx:dy * K + dx + 1, :]        # (1, Cin)
            if ox == 0:
                sh = xs
            else:
                # W shift via rotation (sublane axis) + zero-mask of wrapped cols
                rolled = jnp.roll(xs, -ox, axis=1)           # rolled[:,w]=xs[:,(w+ox)%W]
                valid = jnp.logical_and(col + ox >= 0, col + ox < W)
                sh = jnp.where(valid, rolled, 0.0)
            acc = acc + sh * tap

    # fused BatchNorm (eval-mode) affine; depthwise bias was folded into shift.
    acc = acc * scale_ref[...] + shift_ref[...]

    # fused pointwise 1x1 conv: one MXU matmul, f32 accumulation.
    Wk = ((W + 7) // 8) * 8                                  # keep the reshape 8-aligned
    if Wk != W:
        acc = jnp.concatenate(
            [acc, jnp.zeros((H_out, Wk - W, Cin), jnp.float32)], axis=1)
    lhs = acc.reshape(H_out * Wk, Cin).astype(pw_ref.dtype)
    y = jnp.dot(lhs, pw_ref[...], preferred_element_type=jnp.float32)
    if has_pw_bias:
        y = y + pwb_ref[...]
    y = y.reshape(H_out, Wk, Cout)
    out_ref[0] = y[:, :W_out, :].astype(out_ref.dtype)


# ------------------------------- wrapper --------------------------------------

def separable_conv2d(x_nchw, params):
    """PyTorch-facing NCHW interface; internal compute is NHWC (channels on lanes)."""
    K = params["kernel_size"]
    pad = params["padding"]
    if params["stride"] != 1 or params["dilation"] != 1:
        # TODO(synk): stride/dilation != 1 not implemented in the Pallas path.
        raise NotImplementedError("only stride=1, dilation=1 supported")

    x = jnp.transpose(x_nchw, (0, 2, 3, 1)).astype(jnp.float32)   # NHWC
    N, H, W, Cin = x.shape
    Cout = params["pw_w"].shape[1]
    H_out = H + 2 * pad - K + 1
    W_out = W + 2 * pad - K + 1
    if H_out <= 0 or W_out <= 0 or H_out > H or W_out > W:
        # TODO(synk): over-padded convs (padding > (K-1)//2) not supported in-kernel.
        raise NotImplementedError("unsupported padding/kernel combination")

    # Fold BN (eval mode) + depthwise bias into a single per-channel affine.
    scale = params["bn_gamma"] * lax.rsqrt(params["bn_var"] + BN_EPS)
    shift = params["bn_beta"] - params["bn_mean"] * scale
    if params["dw_b"] is not None:
        shift = shift + params["dw_b"] * scale
    scale = scale.reshape(1, Cin).astype(jnp.float32)
    shift = shift.reshape(1, Cin).astype(jnp.float32)

    has_pw_bias = params["pw_b"] is not None
    pwb = params["pw_b"] if has_pw_bias else jnp.zeros((Cout,), jnp.float32)
    pwb = pwb.reshape(1, Cout).astype(jnp.float32)

    kernel = functools.partial(
        _sepconv_kernel, K=K, pad=pad, H=H, W=W,
        H_out=H_out, W_out=W_out, has_pw_bias=has_pw_bias)

    # TODO(synk): for large feature maps add an H-tile grid axis (halo via
    # pl.Element index_map); a batch-only parallel grid is sufficient here.
    out_nhwc = pl.pallas_call(
        kernel,
        grid=(N,),
        in_specs=[
            pl.BlockSpec((1, H, W, Cin), lambda n: (n, 0, 0, 0)),
            pl.BlockSpec((K * K, Cin), lambda n: (0, 0)),
            pl.BlockSpec((1, Cin), lambda n: (0, 0)),
            pl.BlockSpec((1, Cin), lambda n: (0, 0)),
            pl.BlockSpec((Cin, Cout), lambda n: (0, 0)),
            pl.BlockSpec((1, Cout), lambda n: (0, 0)),
        ],
        out_specs=pl.BlockSpec((1, H_out, W_out, Cout), lambda n: (n, 0, 0, 0)),
        out_shape=jax.ShapeDtypeStruct((N, H_out, W_out, Cout), jnp.float32),
        compiler_params=pltpu.CompilerParams(
            dimension_semantics=("parallel",),
            vmem_limit_bytes=32 * 1024 * 1024),
    )(x, params["dw_w"], scale, shift, params["pw_w"], pwb)

    return jnp.transpose(out_nhwc, (0, 3, 1, 2))                  # back to NCHW


# --------------------------- parameters & reference ---------------------------

def make_separable_conv2d_params(key, in_channels, out_channels, kernel_size=1,
                                 stride=1, padding=0, dilation=1, bias=False,
                                 mm_dtype=jnp.bfloat16):
    k = jax.random.split(key, 8)
    K = kernel_size
    dw_std = 1.0 / math.sqrt(float(K * K))
    pw_std = 1.0 / math.sqrt(float(in_channels))
    dw_torch = dw_std * jax.random.normal(k[0], (in_channels, 1, K, K), jnp.float32)
    pw_torch = pw_std * jax.random.normal(k[1], (out_channels, in_channels), jnp.float32)
    dw_b = 0.1 * jax.random.normal(k[2], (in_channels,), jnp.float32) if bias else None
    pw_b = 0.1 * jax.random.normal(k[3], (out_channels,), jnp.float32) if bias else None
    bn_gamma = 1.0 + 0.2 * jax.random.normal(k[4], (in_channels,), jnp.float32)
    bn_beta = 0.1 * jax.random.normal(k[5], (in_channels,), jnp.float32)
    bn_mean = 0.1 * jax.random.normal(k[6], (in_channels,), jnp.float32)
    bn_var = 0.5 + jax.random.uniform(k[7], (in_channels,), jnp.float32)
    return dict(
        kernel_size=K, stride=stride, padding=padding, dilation=dilation,
        dw_torch=dw_torch, dw_b=dw_b,
        bn_gamma=bn_gamma, bn_beta=bn_beta, bn_mean=bn_mean, bn_var=bn_var,
        pw_torch=pw_torch, pw_b=pw_b,
        # kernel-layout copies: depthwise taps (K*K, Cin); pointwise (Cin, Cout)
        dw_w=jnp.transpose(dw_torch.reshape(in_channels, K * K), (1, 0)),
        pw_w=jnp.transpose(pw_torch, (1, 0)).astype(mm_dtype),
    )


def separable_conv2d_reference(x_nchw, p):
    """Pure f32 JAX/XLA reference (eval-mode BN) for correctness checking."""
    K = p["kernel_size"]; pad = p["padding"]; s = p["stride"]; d = p["dilation"]
    Cin = p["dw_torch"].shape[0]
    y = lax.conv_general_dilated(
        x_nchw.astype(jnp.float32), p["dw_torch"], window_strides=(s, s),
        padding=[(pad, pad), (pad, pad)], rhs_dilation=(d, d),
        dimension_numbers=("NCHW", "OIHW", "NCHW"), feature_group_count=Cin)
    if p["dw_b"] is not None:
        y = y + p["dw_b"][None, :, None, None]
    scale = p["bn_gamma"] * lax.rsqrt(p["bn_var"] + BN_EPS)
    shift = p["bn_beta"] - p["bn_mean"] * scale
    y = y * scale[None, :, None, None] + shift[None, :, None, None]
    pw = p["pw_torch"][:, :, None, None]
    y = lax.conv_general_dilated(
        y, pw, window_strides=(1, 1), padding=[(0, 0), (0, 0)],
        dimension_numbers=("NCHW", "OIHW", "NCHW"))
    if p["pw_b"] is not None:
        y = y + p["pw_b"][None, :, None, None]
    return y


# ----------------------------------- demo -------------------------------------

if __name__ == "__main__":
    root = jax.random.PRNGKey(0)
    #            name               N   H   W  cin cout  K pad  bias   mm_dtype       tol
    configs = [
        ("k3_same_bf16",            2, 16, 16, 32, 128,  3,  1, False, jnp.bfloat16, 3e-2),
        ("k5_same_bias_f32",        2, 16, 16, 32,  64,  5,  2, True,  jnp.float32,  1.5e-2),
        ("k3_valid_f32",            2, 16, 16, 16,  32,  3,  0, False, jnp.float32,  1.5e-2),
    ]
    for (name, N, H, W, cin, cout, k, pad, bias, mm_dtype, tol) in configs:
        root, kp, kx = jax.random.split(root, 3)
        params = make_separable_conv2d_params(
            kp, cin, cout, kernel_size=k, padding=pad, bias=bias, mm_dtype=mm_dtype)
        x = jax.random.normal(kx, (N, cin, H, W), jnp.float32)

        fwd = jax.jit(functools.partial(separable_conv2d, params=params))
        out = jax.block_until_ready(fwd(x))
        ref = jax.block_until_ready(separable_conv2d_reference(x, params))

        h_out = H + 2 * pad - k + 1
        w_out = W + 2 * pad - k + 1
        assert out.shape == (N, cout, h_out, w_out), (name, out.shape)
        assert out.dtype == jnp.float32, (name, out.dtype)

        err = float(jnp.max(jnp.abs(out - ref)))
        denom = float(jnp.max(jnp.abs(ref))) + 1e-6
        assert err <= tol * denom, (name, err, denom, err / denom)

    print("KERNEL_OK")
</pallas_src>

<mosaic_0001>
module attributes {stable_mosaic.version = 11 : i64} {
  func.func @_sepconv_kernel(%arg0: i32, %arg1: memref<1x16x16x32xf32, #tpu.memory_space<vmem>>, %arg2: memref<9x32xf32, #tpu.memory_space<vmem>>, %arg3: memref<1x32xf32, #tpu.memory_space<vmem>>, %arg4: memref<1x32xf32, #tpu.memory_space<vmem>>, %arg5: memref<32x128xbf16, #tpu.memory_space<vmem>>, %arg6: memref<1x128xf32, #tpu.memory_space<vmem>>, %arg7: memref<1x16x16x128xf32, #tpu.memory_space<vmem>>) attributes {dimension_semantics = [#tpu.dimension_semantics<parallel>], iteration_bounds = array<i64: 2>, scalar_prefetch = 0 : i64, scratch_operands = 0 : i64, tpu.core_type = #tpu.core_type<tc>, window_params = [{transform_indices = @transform_0, window_bounds = array<i64: 1, 16, 16, 32>}, {pipeline_mode = #tpu.pipeline_mode<synchronous>, transform_indices = @transform_1, window_bounds = array<i64: 9, 32>}, {pipeline_mode = #tpu.pipeline_mode<synchronous>, transform_indices = @transform_2, window_bounds = array<i64: 1, 32>}, {pipeline_mode = #tpu.pipeline_mode<synchronous>, transform_indices = @transform_3, window_bounds = array<i64: 1, 32>}, {pipeline_mode = #tpu.pipeline_mode<synchronous>, transform_indices = @transform_4, window_bounds = array<i64: 32, 128>}, {pipeline_mode = #tpu.pipeline_mode<synchronous>, transform_indices = @transform_5, window_bounds = array<i64: 1, 128>}, {transform_indices = @transform_6, window_bounds = array<i64: 1, 16, 16, 128>}]} {
    %c0 = arith.constant 0 : index
    %c0_0 = arith.constant 0 : index
    %c0_1 = arith.constant 0 : index
    %c0_2 = arith.constant 0 : index
    %0 = vector.load %arg1[%c0, %c0_0, %c0_1, %c0_2] : memref<1x16x16x32xf32, #tpu.memory_space<vmem>>, vector<1x16x16x32xf32>
    %1 = vector.shape_cast %0 : vector<1x16x16x32xf32> to vector<16x16x32xf32>
    %c0_3 = arith.constant 0 : index
    %c0_4 = arith.constant 0 : index
    %2 = vector.load %arg2[%c0_3, %c0_4] : memref<9x32xf32, #tpu.memory_space<vmem>>, vector<9x32xf32>
    %3 = tpu.iota {dimensions = array<i32: 1>} : vector<1x16x32xi32>
    %cst = arith.constant 0.000000e+00 : f32
    %4 = vector.broadcast %cst : f32 to vector<16x16x32xf32>
    %cst_5 = arith.constant 0.000000e+00 : f32
    %5 = vector.broadcast %cst_5 : f32 to vector<1x16x32xf32>
    %6 = vector.extract_strided_slice %1 {offsets = [0, 0, 0], sizes = [15, 16, 32], strides = [1, 1, 1]} : vector<16x16x32xf32> to vector<15x16x32xf32>
    %7 = tpu.concatenate %5, %6 in 0 : vector<1x16x32xf32>, vector<15x16x32xf32> -> vector<16x16x32xf32>
    %8 = vector.extract_strided_slice %2 {offsets = [0, 0], sizes = [1, 32], strides = [1, 1]} : vector<9x32xf32> to vector<1x32xf32>
    %9 = vector.extract_strided_slice %7 {offsets = [0, 15, 0], sizes = [16, 1, 32], strides = [1, 1, 1]} : vector<16x16x32xf32> to vector<16x1x32xf32>
    %10 = vector.extract_strided_slice %7 {offsets = [0, 0, 0], sizes = [16, 15, 32], strides = [1, 1, 1]} : vector<16x16x32xf32> to vector<16x15x32xf32>
    %11 = tpu.concatenate %9, %10 in 1 : vector<16x1x32xf32>, vector<16x15x32xf32> -> vector<16x16x32xf32>
    %c-1_i32 = arith.constant -1 : i32
    %12 = vector.broadcast %c-1_i32 : i32 to vector<1x16x32xi32>
    %13 = arith.addi %3, %12 : vector<1x16x32xi32>
    %c0_i32 = arith.constant 0 : i32
    %14 = vector.broadcast %c0_i32 : i32 to vector<1x16x32xi32>
    %15 = arith.cmpi sge, %13, %14 : vector<1x16x32xi32>
    %c-1_i32_6 = arith.constant -1 : i32
    %16 = vector.broadcast %c-1_i32_6 : i32 to vector<1x16x32xi32>
    %17 = arith.addi %3, %16 : vector<1x16x32xi32>
    %c16_i32 = arith.constant 16 : i32
    %18 = vector.broadcast %c16_i32 : i32 to vector<1x16x32xi32>
    %19 = arith.cmpi slt, %17, %18 : vector<1x16x32xi32>
    %20 = arith.andi %15, %19 : vector<1x16x32xi1>
    %cst_7 = arith.constant 0.000000e+00 : f32
    %21 = vector.shape_cast %20 : vector<1x16x32xi1> to vector<1x16x32xi1>
    %22 = vector.broadcast %21 : vector<1x16x32xi1> to vector<16x16x32xi1>
    %23 = vector.broadcast %cst_7 : f32 to vector<16x16x32xf32>
    %24 = arith.select %22, %11, %23 : vector<16x16x32xi1>, vector<16x16x32xf32>
    %25 = vector.shape_cast %8 : vector<1x32xf32> to vector<1x1x32xf32>
    %26 = vector.broadcast %25 : vector<1x1x32xf32> to vector<16x16x32xf32>
    %27 = arith.mulf %24, %26 : vector<16x16x32xf32>
    %28 = arith.addf %4, %27 : vector<16x16x32xf32>
    %29 = vector.extract_strided_slice %2 {offsets = [1, 0], sizes = [1, 32], strides = [1, 1]} : vector<9x32xf32> to vector<1x32xf32>
    %30 = vector.shape_cast %29 : vector<1x32xf32> to vector<1x1x32xf32>
    %31 = vector.broadcast %30 : vector<1x1x32xf32> to vector<16x16x32xf32>
    %32 = arith.mulf %7, %31 : vector<16x16x32xf32>
    %33 = arith.addf %28, %32 : vector<16x16x32xf32>
    %34 = vector.extract_strided_slice %2 {offsets = [2, 0], sizes = [1, 32], strides = [1, 1]} : vector<9x32xf32> to vector<1x32xf32>
    %35 = vector.extract_strided_slice %7 {offsets = [0, 1, 0], sizes = [16, 15, 32], strides = [1, 1, 1]} : vector<16x16x32xf32> to vector<16x15x32xf32>
    %36 = vector.extract_strided_slice %7 {offsets = [0, 0, 0], sizes = [16, 1, 32], strides = [1, 1, 1]} : vector<16x16x32xf32> to vector<16x1x32xf32>
    %37 = tpu.concatenate %35, %36 in 1 : vector<16x15x32xf32>, vector<16x1x32xf32> -> vector<16x16x32xf32>
    %c1_i32 = arith.constant 1 : i32
    %38 = vector.broadcast %c1_i32 : i32 to vector<1x16x32xi32>
    %39 = arith.addi %3, %38 : vector<1x16x32xi32>
    %c0_i32_8 = arith.constant 0 : i32
    %40 = vector.broadcast %c0_i32_8 : i32 to vector<1x16x32xi32>
    %41 = arith.cmpi sge, %39, %40 : vector<1x16x32xi32>
    %c1_i32_9 = arith.constant 1 : i32
    %42 = vector.broadcast %c1_i32_9 : i32 to vector<1x16x32xi32>
    %43 = arith.addi %3, %42 : vector<1x16x32xi32>
    %c16_i32_10 = arith.constant 16 : i32
    %44 = vector.broadcast %c16_i32_10 : i32 to vector<1x16x32xi32>
    %45 = arith.cmpi slt, %43, %44 : vector<1x16x32xi32>
    %46 = arith.andi %41, %45 : vector<1x16x32xi1>
    %cst_11 = arith.constant 0.000000e+00 : f32
    %47 = vector.shape_cast %46 : vector<1x16x32xi1> to vector<1x16x32xi1>
    %48 = vector.broadcast %47 : vector<1x16x32xi1> to vector<16x16x32xi1>
    %49 = vector.broadcast %cst_11 : f32 to vector<16x16x32xf32>
    %50 = arith.select %48, %37, %49 : vector<16x16x32xi1>, vector<16x16x32xf32>
    %51 = vector.shape_cast %34 : vector<1x32xf32> to vector<1x1x32xf32>
    %52 = vector.broadcast %51 : vector<1x1x32xf32> to vector<16x16x32xf32>
    %53 = arith.mulf %50, %52 : vector<16x16x32xf32>
    %54 = arith.addf %33, %53 : vector<16x16x32xf32>
    %55 = vector.extract_strided_slice %2 {offsets = [3, 0], sizes = [1, 32], strides = [1, 1]} : vector<9x32xf32> to vector<1x32xf32>
    %56 = vector.extract_strided_slice %1 {offsets = [0, 15, 0], sizes = [16, 1, 32], strides = [1, 1, 1]} : vector<16x16x32xf32> to vector<16x1x32xf32>
    %57 = vector.extract_strided_slice %1 {offsets = [0, 0, 0], sizes = [16, 15, 32], strides = [1, 1, 1]} : vector<16x16x32xf32> to vector<16x15x32xf32>
    %58 = tpu.concatenate %56, %57 in 1 : vector<16x1x32xf32>, vector<16x15x32xf32> -> vector<16x16x32xf32>
    %c-1_i32_12 = arith.constant -1 : i32
    %59 = vector.broadcast %c-1_i32_12 : i32 to vector<1x16x32xi32>
    %60 = arith.addi %3, %59 : vector<1x16x32xi32>
    %c0_i32_13 = arith.constant 0 : i32
    %61 = vector.broadcast %c0_i32_13 : i32 to vector<1x16x32xi32>
    %62 = arith.cmpi sge, %60, %61 : vector<1x16x32xi32>
    %c-1_i32_14 = arith.constant -1 : i32
    %63 = vector.broadcast %c-1_i32_14 : i32 to vector<1x16x32xi32>
    %64 = arith.addi %3, %63 : vector<1x16x32xi32>
    %c16_i32_15 = arith.constant 16 : i32
    %65 = vector.broadcast %c16_i32_15 : i32 to vector<1x16x32xi32>
    %66 = arith.cmpi slt, %64, %65 : vector<1x16x32xi32>
    %67 = arith.andi %62, %66 : vector<1x16x32xi1>
    %cst_16 = arith.constant 0.000000e+00 : f32
    %68 = vector.shape_cast %67 : vector<1x16x32xi1> to vector<1x16x32xi1>
    %69 = vector.broadcast %68 : vector<1x16x32xi1> to vector<16x16x32xi1>
    %70 = vector.broadcast %cst_16 : f32 to vector<16x16x32xf32>
    %71 = arith.select %69, %58, %70 : vector<16x16x32xi1>, vector<16x16x32xf32>
    %72 = vector.shape_cast %55 : vector<1x32xf32> to vector<1x1x32xf32>
    %73 = vector.broadcast %72 : vector<1x1x32xf32> to vector<16x16x32xf32>
    %74 = arith.mulf %71, %73 : vector<16x16x32xf32>
    %75 = arith.addf %54, %74 : vector<16x16x32xf32>
    %76 = vector.extract_strided_slice %2 {offsets = [4, 0], sizes = [1, 32], strides = [1, 1]} : vector<9x32xf32> to vector<1x32xf32>
    %77 = vector.shape_cast %76 : vector<1x32xf32> to vector<1x1x32xf32>
    %78 = vector.broadcast %77 : vector<1x1x32xf32> to vector<16x16x32xf32>
    %79 = arith.mulf %1, %78 : vector<16x16x32xf32>
    %80 = arith.addf %75, %79 : vector<16x16x32xf32>
    %81 = vector.extract_strided_slice %2 {offsets = [5, 0], sizes = [1, 32], strides = [1, 1]} : vector<9x32xf32> to vector<1x32xf32>
    %82 = vector.extract_strided_slice %1 {offsets = [0, 1, 0], sizes = [16, 15, 32], strides = [1, 1, 1]} : vector<16x16x32xf32> to vector<16x15x32xf32>
    %83 = vector.extract_strided_slice %1 {offsets = [0, 0, 0], sizes = [16, 1, 32], strides = [1, 1, 1]} : vector<16x16x32xf32> to vector<16x1x32xf32>
    %84 = tpu.concatenate %82, %83 in 1 : vector<16x15x32xf32>, vector<16x1x32xf32> -> vector<16x16x32xf32>
    %c1_i32_17 = arith.constant 1 : i32
    %85 = vector.broadcast %c1_i32_17 : i32 to vector<1x16x32xi32>
    %86 = arith.addi %3, %85 : vector<1x16x32xi32>
    %c0_i32_18 = arith.constant 0 : i32
    %87 = vector.broadcast %c0_i32_18 : i32 to vector<1x16x32xi32>
    %88 = arith.cmpi sge, %86, %87 : vector<1x16x32xi32>
    %c1_i32_19 = arith.constant 1 : i32
    %89 = vector.broadcast %c1_i32_19 : i32 to vector<1x16x32xi32>
    %90 = arith.addi %3, %89 : vector<1x16x32xi32>
    %c16_i32_20 = arith.constant 16 : i32
    %91 = vector.broadcast %c16_i32_20 : i32 to vector<1x16x32xi32>
    %92 = arith.cmpi slt, %90, %91 : vector<1x16x32xi32>
    %93 = arith.andi %88, %92 : vector<1x16x32xi1>
    %cst_21 = arith.constant 0.000000e+00 : f32
    %94 = vector.shape_cast %93 : vector<1x16x32xi1> to vector<1x16x32xi1>
    %95 = vector.broadcast %94 : vector<1x16x32xi1> to vector<16x16x32xi1>
    %96 = vector.broadcast %cst_21 : f32 to vector<16x16x32xf32>
    %97 = arith.select %95, %84, %96 : vector<16x16x32xi1>, vector<16x16x32xf32>
    %98 = vector.shape_cast %81 : vector<1x32xf32> to vector<1x1x32xf32>
    %99 = vector.broadcast %98 : vector<1x1x32xf32> to vector<16x16x32xf32>
    %100 = arith.mulf %97, %99 : vector<16x16x32xf32>
    %101 = arith.addf %80, %100 : vector<16x16x32xf32>
    %102 = vector.extract_strided_slice %1 {offsets = [1, 0, 0], sizes = [15, 16, 32], strides = [1, 1, 1]} : vector<16x16x32xf32> to vector<15x16x32xf32>
    %cst_22 = arith.constant 0.000000e+00 : f32
    %103 = vector.broadcast %cst_22 : f32 to vector<1x16x32xf32>
    %104 = tpu.concatenate %102, %103 in 0 : vector<15x16x32xf32>, vector<1x16x32xf32> -> vector<16x16x32xf32>
    %105 = vector.extract_strided_slice %2 {offsets = [6, 0], sizes = [1, 32], strides = [1, 1]} : vector<9x32xf32> to vector<1x32xf32>
    %106 = vector.extract_strided_slice %104 {offsets = [0, 15, 0], sizes = [16, 1, 32], strides = [1, 1, 1]} : vector<16x16x32xf32> to vector<16x1x32xf32>
    %107 = vector.extract_strided_slice %104 {offsets = [0, 0, 0], sizes = [16, 15, 32], strides = [1, 1, 1]} : vector<16x16x32xf32> to vector<16x15x32xf32>
    %108 = tpu.concatenate %106, %107 in 1 : vector<16x1x32xf32>, vector<16x15x32xf32> -> vector<16x16x32xf32>
    %c-1_i32_23 = arith.constant -1 : i32
    %109 = vector.broadcast %c-1_i32_23 : i32 to vector<1x16x32xi32>
    %110 = arith.addi %3, %109 : vector<1x16x32xi32>
    %c0_i32_24 = arith.constant 0 : i32
    %111 = vector.broadcast %c0_i32_24 : i32 to vector<1x16x32xi32>
    %112 = arith.cmpi sge, %110, %111 : vector<1x16x32xi32>
    %c-1_i32_25 = arith.constant -1 : i32
    %113 = vector.broadcast %c-1_i32_25 : i32 to vector<1x16x32xi32>
    %114 = arith.addi %3, %113 : vector<1x16x32xi32>
    %c16_i32_26 = arith.constant 16 : i32
    %115 = vector.broadcast %c16_i32_26 : i32 to vector<1x16x32xi32>
    %116 = arith.cmpi slt, %114, %115 : vector<1x16x32xi32>
    %117 = arith.andi %112, %116 : vector<1x16x32xi1>
    %cst_27 = arith.constant 0.000000e+00 : f32
    %118 = vector.shape_cast %117 : vector<1x16x32xi1> to vector<1x16x32xi1>
    %119 = vector.broadcast %118 : vector<1x16x32xi1> to vector<16x16x32xi1>
    %120 = vector.broadcast %cst_27 : f32 to vector<16x16x32xf32>
    %121 = arith.select %119, %108, %120 : vector<16x16x32xi1>, vector<16x16x32xf32>
    %122 = vector.shape_cast %105 : vector<1x32xf32> to vector<1x1x32xf32>
    %123 = vector.broadcast %122 : vector<1x1x32xf32> to vector<16x16x32xf32>
    %124 = arith.mulf %121, %123 : vector<16x16x32xf32>
    %125 = arith.addf %101, %124 : vector<16x16x32xf32>
    %126 = vector.extract_strided_slice %2 {offsets = [7, 0], sizes = [1, 32], strides = [1, 1]} : vector<9x32xf32> to vector<1x32xf32>
    %127 = vector.shape_cast %126 : vector<1x32xf32> to vector<1x1x32xf32>
    %128 = vector.broadcast %127 : vector<1x1x32xf32> to vector<16x16x32xf32>
    %129 = arith.mulf %104, %128 : vector<16x16x32xf32>
    %130 = arith.addf %125, %129 : vector<16x16x32xf32>
    %131 = vector.extract_strided_slice %2 {offsets = [8, 0], sizes = [1, 32], strides = [1, 1]} : vector<9x32xf32> to vector<1x32xf32>
    %132 = vector.extract_strided_slice %104 {offsets = [0, 1, 0], sizes = [16, 15, 32], strides = [1, 1, 1]} : vector<16x16x32xf32> to vector<16x15x32xf32>
    %133 = vector.extract_strided_slice %104 {offsets = [0, 0, 0], sizes = [16, 1, 32], strides = [1, 1, 1]} : vector<16x16x32xf32> to vector<16x1x32xf32>
    %134 = tpu.concatenate %132, %133 in 1 : vector<16x15x32xf32>, vector<16x1x32xf32> -> vector<16x16x32xf32>
    %c1_i32_28 = arith.constant 1 : i32
    %135 = vector.broadcast %c1_i32_28 : i32 to vector<1x16x32xi32>
    %136 = arith.addi %3, %135 : vector<1x16x32xi32>
    %c0_i32_29 = arith.constant 0 : i32
    %137 = vector.broadcast %c0_i32_29 : i32 to vector<1x16x32xi32>
    %138 = arith.cmpi sge, %136, %137 : vector<1x16x32xi32>
    %c1_i32_30 = arith.constant 1 : i32
    %139 = vector.broadcast %c1_i32_30 : i32 to vector<1x16x32xi32>
    %140 = arith.addi %3, %139 : vector<1x16x32xi32>
    %c16_i32_31 = arith.constant 16 : i32
    %141 = vector.broadcast %c16_i32_31 : i32 to vector<1x16x32xi32>
    %142 = arith.cmpi slt, %140, %141 : vector<1x16x32xi32>
    %143 = arith.andi %138, %142 : vector<1x16x32xi1>
    %cst_32 = arith.constant 0.000000e+00 : f32
    %144 = vector.shape_cast %143 : vector<1x16x32xi1> to vector<1x16x32xi1>
    %145 = vector.broadcast %144 : vector<1x16x32xi1> to vector<16x16x32xi1>
    %146 = vector.broadcast %cst_32 : f32 to vector<16x16x32xf32>
    %147 = arith.select %145, %134, %146 : vector<16x16x32xi1>, vector<16x16x32xf32>
    %148 = vector.shape_cast %131 : vector<1x32xf32> to vector<1x1x32xf32>
    %149 = vector.broadcast %148 : vector<1x1x32xf32> to vector<16x16x32xf32>
    %150 = arith.mulf %147, %149 : vector<16x16x32xf32>
    %151 = arith.addf %130, %150 : vector<16x16x32xf32>
    %c0_33 = arith.constant 0 : index
    %c0_34 = arith.constant 0 : index
    %152 = vector.load %arg3[%c0_33, %c0_34] : memref<1x32xf32, #tpu.memory_space<vmem>>, vector<1x32xf32>
    %153 = vector.shape_cast %152 : vector<1x32xf32> to vector<1x1x32xf32>
    %154 = vector.broadcast %153 : vector<1x1x32xf32> to vector<16x16x32xf32>
    %155 = arith.mulf %151, %154 : vector<16x16x32xf32>
    %c0_35 = arith.constant 0 : index
    %c0_36 = arith.constant 0 : index
    %156 = vector.load %arg4[%c0_35, %c0_36] : memref<1x32xf32, #tpu.memory_space<vmem>>, vector<1x32xf32>
    %157 = vector.shape_cast %156 : vector<1x32xf32> to vector<1x1x32xf32>
    %158 = vector.broadcast %157 : vector<1x1x32xf32> to vector<16x16x32xf32>
    %159 = arith.addf %155, %158 : vector<16x16x32xf32>
    %160 = vector.shape_cast %159 : vector<16x16x32xf32> to vector<256x32xf32>
    %161 = arith.truncf %160 : vector<256x32xf32> to vector<256x32xbf16>
    %c0_37 = arith.constant 0 : index
    %c0_38 = arith.constant 0 : index
    %162 = vector.load %arg5[%c0_37, %c0_38] : memref<32x128xbf16, #tpu.memory_space<vmem>>, vector<32x128xbf16>
    %cst_39 = arith.constant dense<0.000000e+00> : vector<256x128xf32>
    %163 = tpu.matmul %161, %162, %cst_39 {dimension_numbers = #tpu.dot_dimension_numbers<[1], [0], [0], [1], [0, 0, 1, 1], [], []>} : vector<256x32xbf16>, vector<32x128xbf16>, vector<256x128xf32> -> vector<256x128xf32>
    %164 = vector.shape_cast %163 : vector<256x128xf32> to vector<16x16x128xf32>
    %c0_40 = arith.constant 0 : index
    %c0_41 = arith.constant 0 : index
    %c0_42 = arith.constant 0 : index
    %c0_43 = arith.constant 0 : index
    %165 = vector.load %arg7[%c0_40, %c0_41, %c0_42, %c0_43] : memref<1x16x16x128xf32, #tpu.memory_space<vmem>>, vector<1x16x16x128xf32>
    %166 = vector.shape_cast %165 : vector<1x16x16x128xf32> to vector<16x16x128xf32>
    %167 = vector.shape_cast %164 : vector<16x16x128xf32> to vector<1x16x16x128xf32>
    tpu.vector_store %arg7[%c0_40, %c0_41, %c0_42, %c0_43], %167 {strides = array<i32>} : memref<1x16x16x128xf32, #tpu.memory_space<vmem>>, vector<1x16x16x128xf32>,
    return
  }
  func.func @transform_0(%arg0: i32) -> (i32, i32, i32, i32) {
    %c0_i32 = arith.constant 0 : i32
    %c0_i32_0 = arith.constant 0 : i32
    %c0_i32_1 = arith.constant 0 : i32
    %c0_i32_2 = arith.constant 0 : i32
    return %arg0, %c0_i32, %c0_i32_0, %c0_i32_1 : i32, i32, i32, i32
  }
  func.func @transform_1(%arg0: i32) -> (i32, i32) {
    %c0_i32 = arith.constant 0 : i32
    %c0_i32_0 = arith.constant 0 : i32
    %c0_i32_1 = arith.constant 0 : i32
    return %c0_i32, %c0_i32_0 : i32, i32
  }
  func.func @transform_2(%arg0: i32) -> (i32, i32) {
    %c0_i32 = arith.constant 0 : i32
    %c0_i32_0 = arith.constant 0 : i32
    %c0_i32_1 = arith.constant 0 : i32
    return %c0_i32, %c0_i32_0 : i32, i32
  }
  func.func @transform_3(%arg0: i32) -> (i32, i32) {
    %c0_i32 = arith.constant 0 : i32
    %c0_i32_0 = arith.constant 0 : i32
    %c0_i32_1 = arith.constant 0 : i32
    return %c0_i32, %c0_i32_0 : i32, i32
  }
  func.func @transform_4(%arg0: i32) -> (i32, i32) {
    %c0_i32 = arith.constant 0 : i32
    %c0_i32_0 = arith.constant 0 : i32
    %c0_i32_1 = arith.constant 0 : i32
    return %c0_i32, %c0_i32_0 : i32, i32
  }
  func.func @transform_5(%arg0: i32) -> (i32, i32) {
    %c0_i32 = arith.constant 0 : i32
    %c0_i32_0 = arith.constant 0 : i32
    %c0_i32_1 = arith.constant 0 : i32
    return %c0_i32, %c0_i32_0 : i32, i32
  }
  func.func @transform_6(%arg0: i32) -> (i32, i32, i32, i32) {
    %c0_i32 = arith.constant 0 : i32
    %c0_i32_0 = arith.constant 0 : i32
    %c0_i32_1 = arith.constant 0 : i32
    %c0_i32_2 = arith.constant 0 : i32
    return %arg0, %c0_i32, %c0_i32_0, %c0_i32_1 : i32, i32, i32, i32
  }
}

</mosaic_0001>

<llo_original>
// kernel: separable_conv2d.1
$region0: #{separable_conv2d.1}
  #allocation0 [shape = 'u32[]', space=smem, size = 0x4, offset = 0x4, fixed_abs, tag = 'smem constant byte address 0x4 - core index']
  #allocation1 [shape = 'u32[72,128]{1,0:T(1,128)}', space=vmem, size = 0x9000, scoped, tag = 'internal scratch']
  %s0 = inlined_call_operand.hbm [shape: f32[2,16,16,32], index: 0, kind: input, shape index: {}]
  %s1 = inlined_call_operand.hbm [shape: f32[9,32], index: 1, kind: input, shape index: {}]
  %s2 = inlined_call_operand.vmem [shape: f32[1,32], index: 2, kind: input, shape index: {}]
  %s3 = inlined_call_operand.vmem [shape: f32[1,32], index: 3, kind: input, shape index: {}]
  %s4 = inlined_call_operand.hbm [shape: bf16[32,128], index: 4, kind: input, shape index: {}]
  %s5 = inlined_call_operand.vmem [shape: f32[1,128], index: 5, kind: input, shape index: {}]
  %s6 = inlined_call_operand.hbm [shape: f32[2,16,16,128], index: 6, kind: output, shape index: {}]
  %s7 = sld [smem:[#allocation0]]
  $region69: #{separable_conv2d.1} parent=0
    _
  %s9 = ssub.s32 1, %s7
  %s10 = scalar_select 0, %s9, %s7
  $region1: #{separable_conv2d.1} parent=0
    #allocation2 [shape = 'u8[262144]{0}', space=vmem, size = 0x40000, scoped, tag = 'input window, operand 0']
    #allocation3 [shape = 's32[2]{0}', space=sflag, size = 0x8, scoped, tag = 'scoped memory for separable_conv2d.1']
    #allocation4 [shape = 's32[2]{0}', space=sflag, size = 0x8, scoped, tag = 'scoped memory for separable_conv2d.1']
    #allocation5 [shape = 'u8[8192]{0}', space=vmem, size = 0x2000, scoped, tag = 'input window, operand 1, single buffered']
    #allocation6 [shape = 's32[1]{0}', space=sflag, size = 0x4, scoped, tag = 'scoped memory for separable_conv2d.1']
    #allocation7 [shape = 'u8[8192]{0}', space=vmem, size = 0x2000, scoped, tag = 'input window, operand 4, single buffered']
    #allocation8 [shape = 'u8[262144]{0}', space=vmem, size = 0x40000, scoped, tag = 'output window, operand 0']
    %11 = vsyncpa [#allocation3], 0
    %s12 = scalar_lea.sflag [#allocation3], 1
    %13 = vsyncpa %s12, 0
    %14 = vsyncpa [#allocation6], 0
    %15 = vsyncpa [#allocation4], 0
    %s16 = scalar_lea.sflag [#allocation4], 1
    %17 = vsyncpa %s16, 0
    loop: start=0, step=1, limit=4
    $region2: #{separable_conv2d.1} parent=1 // loop_pre_header
      _
    $region3: #{separable_conv2d.1} parent=1 // loop_header
      %s19 = sphi 0, %s23
      %p20 = scmp.ge.s32.totalorder %s19, 4
      %s29 = sphi 0, %s31
      %s32 = sphi 0, %s29
      %s33 = sphi 0, %s32
      %s49 = sphi 0, %s33
      %s53 = sphi 0, %s53
      %s55 = sphi 0, %s53
      %s56 = sphi 0, %s55
      %s70 = sphi 0, %s56
      %s74 = sphi 0, %s74
      %s76 = sphi 0, %s74
      %s77 = sphi 0, %s76
      %s91 = sphi 0, %s77
      %s95 = sphi 0, %s95
      %s97 = sphi 0, %s95
      %s98 = sphi 0, %s97
      %s112 = sphi 0, %s98
      %s116 = sphi 0, %s116
      %s118 = sphi 0, %s116
      %s119 = sphi 0, %s118
      %s133 = sphi 0, %s119
      %s137 = sphi 0, %s137
      %s139 = sphi 0, %s137
      %s140 = sphi 0, %s139
      %s154 = sphi 0, %s140
      %s160 = sphi 0, %s162
      %s163 = sphi 0, %s160
      %s164 = sphi 0, %s163
      %s180 = sphi 0, %s164
    $region4: #{separable_conv2d.1} parent=1 // loop_header_branch
      %22 = sbr.rel (%p20) target = $region8
    $region5: #{separable_conv2d.1} parent=1 // loop_body
      %s24 = ssub.s32 %s19, 1
      %s25 = ssub.s32 %s19, 2
      %s26 = sadd.s32 %s19, 1
      %s27 = ssub.s32 %s19, %s26
      %p28 = scmp.eq.s32.totalorder %s27, 0
      %s30 = sadd.s32 %s29, 1
      %s31 = scalar_select %p28, %s29, %s30
      %p34 = pneg %p28
      %p35 = scmp.eq.s32.totalorder %s19, 1
      %p36 = por %p34, %p35
      %p37 = scmp.ne.s32.totalorder %s29, %s32
      %p38 = scmp.eq.s32.totalorder %s19, 0
      %p39 = por %p37, %p38
      %p40 = scmp.ne.s32.totalorder %s29, %s32
      %p41 = scmp.eq.s32.totalorder %s24, 1
      %p42 = por %p40, %p41
      %p43 = scmp.ne.s32.totalorder %s32, %s33
      %p44 = scmp.eq.s32.totalorder %s24, 0
      %p45 = por %p43, %p44
      %p46 = scmp.ne.s32.totalorder %s32, %s33
      %p47 = scmp.eq.s32.totalorder %s25, 1
      %p48 = por %p46, %p47
      %p50 = scmp.ne.s32.totalorder %s33, %s49
      %p51 = scmp.eq.s32.totalorder %s25, 0
      %p52 = por %p50, %p51
      %s54 = sadd.s32 %s53, 1
      %p57 = scmp.eq.s32.totalorder %s19, 1
      %p58 = scmp.ne.s32.totalorder %s53, %s55
      %p59 = scmp.eq.s32.totalorder %s19, 0
      %p60 = por %p58, %p59
      %p61 = scmp.ne.s32.totalorder %s53, %s55
      %p62 = scmp.eq.s32.totalorder %s24, 1
      %p63 = por %p61, %p62
      %p64 = scmp.ne.s32.totalorder %s55, %s56
      %p65 = scmp.eq.s32.totalorder %s24, 0
      %p66 = por %p64, %p65
      %p67 = scmp.ne.s32.totalorder %s55, %s56
      %p68 = scmp.eq.s32.totalorder %s25, 1
      %p69 = por %p67, %p68
      %p71 = scmp.ne.s32.totalorder %s56, %s70
      %p72 = scmp.eq.s32.totalorder %s25, 0
      %p73 = por %p71, %p72
      %s75 = sadd.s32 %s74, 1
      %p78 = scmp.eq.s32.totalorder %s19, 1
      %p79 = scmp.ne.s32.totalorder %s74, %s76
      %p80 = scmp.eq.s32.totalorder %s19, 0
      %p81 = por %p79, %p80
      %p82 = scmp.ne.s32.totalorder %s74, %s76
      %p83 = scmp.eq.s32.totalorder %s24, 1
      %p84 = por %p82, %p83
      %p85 = scmp.ne.s32.totalorder %s76, %s77
      %p86 = scmp.eq.s32.totalorder %s24, 0
      %p87 = por %p85, %p86
      %p88 = scmp.ne.s32.totalorder %s76, %s77
      %p89 = scmp.eq.s32.totalorder %s25, 1
      %p90 = por %p88, %p89
      %p92 = scmp.ne.s32.totalorder %s77, %s91
      %p93 = scmp.eq.s32.totalorder %s25, 0
      %p94 = por %p92, %p93
      %s96 = sadd.s32 %s95, 1
      %p99 = scmp.eq.s32.totalorder %s19, 1
      %p100 = scmp.ne.s32.totalorder %s95, %s97
      %p101 = scmp.eq.s32.totalorder %s19, 0
      %p102 = por %p100, %p101
      %p103 = scmp.ne.s32.totalorder %s95, %s97
      %p104 = scmp.eq.s32.totalorder %s24, 1
      %p105 = por %p103, %p104
      %p106 = scmp.ne.s32.totalorder %s97, %s98
      %p107 = scmp.eq.s32.totalorder %s24, 0
      %p108 = por %p106, %p107
      %p109 = scmp.ne.s32.totalorder %s97, %s98
      %p110 = scmp.eq.s32.totalorder %s25, 1
      %p111 = por %p109, %p110
      %p113 = scmp.ne.s32.totalorder %s98, %s112
      %p114 = scmp.eq.s32.totalorder %s25, 0
      %p115 = por %p113, %p114
      %s117 = sadd.s32 %s116, 1
      %p120 = scmp.eq.s32.totalorder %s19, 1
      %p121 = scmp.ne.s32.totalorder %s116, %s118
      %p122 = scmp.eq.s32.totalorder %s19, 0
      %p123 = por %p121, %p122
      %p124 = scmp.ne.s32.totalorder %s116, %s118
      %p125 = scmp.eq.s32.totalorder %s24, 1
      %p126 = por %p124, %p125
      %p127 = scmp.ne.s32.totalorder %s118, %s119
      %p128 = scmp.eq.s32.totalorder %s24, 0
      %p129 = por %p127, %p128
      %p130 = scmp.ne.s32.totalorder %s118, %s119
      %p131 = scmp.eq.s32.totalorder %s25, 1
      %p132 = por %p130, %p131
      %p134 = scmp.ne.s32.totalorder %s119, %s133
      %p135 = scmp.eq.s32.totalorder %s25, 0
      %p136 = por %p134, %p135
      %s138 = sadd.s32 %s137, 1
      %p141 = scmp.eq.s32.totalorder %s19, 1
      %p142 = scmp.ne.s32.totalorder %s137, %s139
      %p143 = scmp.eq.s32.totalorder %s19, 0
      %p144 = por %p142, %p143
      %p145 = scmp.ne.s32.totalorder %s137, %s139
      %p146 = scmp.eq.s32.totalorder %s24, 1
      %p147 = por %p145, %p146
      %p148 = scmp.ne.s32.totalorder %s139, %s140
      %p149 = scmp.eq.s32.totalorder %s24, 0
      %p150 = por %p148, %p149
      %p151 = scmp.ne.s32.totalorder %s139, %s140
      %p152 = scmp.eq.s32.totalorder %s25, 1
      %p153 = por %p151, %p152
      %p155 = scmp.ne.s32.totalorder %s140, %s154
      %p156 = scmp.eq.s32.totalorder %s25, 0
      %p157 = por %p155, %p156
      %s158 = ssub.s32 %s19, %s26
      %p159 = scmp.eq.s32.totalorder %s158, 0
      %s161 = sadd.s32 %s160, 1
      %s162 = scalar_select %p159, %s160, %s161
      %p165 = pneg %p159
      %p166 = scmp.eq.s32.totalorder %s19, 1
      %p167 = por %p165, %p166
      %p168 = scmp.ne.s32.totalorder %s160, %s163
      %p169 = scmp.eq.s32.totalorder %s19, 0
      %p170 = por %p168, %p169
      %p171 = scmp.ne.s32.totalorder %s160, %s163
      %p172 = scmp.eq.s32.totalorder %s24, 1
      %p173 = por %p171, %p172
      %p174 = scmp.ne.s32.totalorder %s163, %s164
      %p175 = scmp.eq.s32.totalorder %s24, 0
      %p176 = por %p174, %p175
      %p177 = scmp.ne.s32.totalorder %s163, %s164
      %p178 = scmp.eq.s32.totalorder %s25, 1
      %p179 = por %p177, %p178
      %p181 = scmp.ne.s32.totalorder %s164, %s180
      %p182 = scmp.eq.s32.totalorder %s25, 0
      %p183 = por %p181, %p182
      %p184 = scmp.le.s32.totalorder 1, %s19
      %p185 = scmp.lt.s32.totalorder %s19, 3
      %p186 = pnand %p184, %p185
      %p187 = pneg %p186
      // Predicated region
      $region9: #{separable_conv2d.1} parent=5 // pred_check
        _
      $region10: #{separable_conv2d.1} parent=5 // pred_check_branch
        %189 = sbr.rel (%p186) target = $region12
      $region11: #{separable_conv2d.1} parent=5 // pred_region
        %s190 = ssub.s32 %s19, 1
        // Predicated region
        $region13: #{separable_conv2d.1} parent=11 // pred_check
          %p191 = pneg %p66
        $region14: #{separable_conv2d.1} parent=11 // pred_check_branch
          %193 = sbr.rel (%p191) target = $region16
        $region15: #{separable_conv2d.1} parent=11 // pred_region
          %195 = vsyncadd [#allocation6], 0
          %s196 = sshll.u32 %s1, 4
          %s197 = int_to_ptr.hbm [resolvable:$true] %s196
          %s198 = sshll.u32 [#allocation5], 4
          %s199 = int_to_ptr.vmem [resolvable:$true] %s198
          %204 = dma.hbm_to_vmem [thread:$0]  %s197, 256, %s199, [#allocation6], 128, 128, 8
        $region16: #{separable_conv2d.1} parent=11 // pred_fallthru
          _
        // Predicated region
        $region17: #{separable_conv2d.1} parent=11 // pred_check
          %p205 = pneg %p87
        $region18: #{separable_conv2d.1} parent=11 // pred_check_branch
          %207 = sbr.rel (%p205) target = $region20
        $region19: #{separable_conv2d.1} parent=11 // pred_region
          _
        $region20: #{separable_conv2d.1} parent=11 // pred_fallthru
          _
        // Predicated region
        $region21: #{separable_conv2d.1} parent=11 // pred_check
          %p208 = pneg %p108
        $region22: #{separable_conv2d.1} parent=11 // pred_check_branch
          %210 = sbr.rel (%p208) target = $region24
        $region23: #{separable_conv2d.1} parent=11 // pred_region
          _
        $region24: #{separable_conv2d.1} parent=11 // pred_fallthru
          _
        // Predicated region
        $region25: #{separable_conv2d.1} parent=11 // pred_check
          %p211 = pneg %p129
        $region26: #{separable_conv2d.1} parent=11 // pred_check_branch
          %213 = sbr.rel (%p211) target = $region28
        $region27: #{separable_conv2d.1} parent=11 // pred_region
          %215 = vsyncadd [#allocation6], 0
          %s216 = sshll.u32 %s4, 4
          %s217 = int_to_ptr.hbm [resolvable:$true] %s216
          %s218 = sshll.u32 [#allocation7], 4
          %s219 = int_to_ptr.vmem [resolvable:$true] %s218
          %224 = dma.hbm_to_vmem [thread:$0]  %s217, 256, %s219, [#allocation6], 64, 64, 4
        $region28: #{separable_conv2d.1} parent=11 // pred_fallthru
          _
        // Predicated region
        $region29: #{separable_conv2d.1} parent=11 // pred_check
          %p225 = pneg %p150
        $region30: #{separable_conv2d.1} parent=11 // pred_check_branch
          %227 = sbr.rel (%p225) target = $region32
        $region31: #{separable_conv2d.1} parent=11 // pred_region
          _
        $region32: #{separable_conv2d.1} parent=11 // pred_fallthru
          _
      $region12: #{separable_conv2d.1} parent=5 // pred_fallthru
        _
      %p228 = scmp.lt.s32.totalorder %s19, 2
      // Predicated region
      $region33: #{separable_conv2d.1} parent=5 // pred_check
        %p229 = pneg %p228
      $region34: #{separable_conv2d.1} parent=5 // pred_check_branch
        %231 = sbr.rel (%p229) target = $region36
      $region35: #{separable_conv2d.1} parent=5 // pred_region
        // Predicated region
        $region37: #{separable_conv2d.1} parent=35 // pred_check
          %p232 = pneg %p39
        $region38: #{separable_conv2d.1} parent=35 // pred_check_branch
          %234 = sbr.rel (%p232) target = $region40
        $region39: #{separable_conv2d.1} parent=35 // pred_region
          %s235 = sand.u32 %s29, 1
          %s236 = scalar_lea.sflag [#allocation3], %s235
          %s237 = sand.u32 %s29, 1
          %s238 = smul.addr %s237, 256
          %s239 = scalar_lea.vmem [#allocation2], %s238
          %241 = vsyncadd %s236, 0
          %s242 = smul.addr %s19, 32
          %s243 = smul.addr %s242, 8
          %s244 = scalar_lea.hbm %s0, %s243
          %s245 = sshll.u32 %s244, 4
          %s246 = int_to_ptr.hbm [resolvable:$true] %s245
          %s247 = sshll.u32 %s239, 4
          %s248 = int_to_ptr.vmem [resolvable:$true] %s247
          %253 = dma.hbm_to_vmem [thread:$0]  %s246, 4096, %s248, %s236, 128, 128, 8
        $region40: #{separable_conv2d.1} parent=35 // pred_fallthru
          _
      $region36: #{separable_conv2d.1} parent=5 // pred_fallthru
        _
      %p254 = scmp.le.s32.totalorder 1, %s19
      %p255 = scmp.lt.s32.totalorder %s19, 3
      %p256 = pnand %p254, %p255
      %p257 = pneg %p256
      // Predicated region
      $region41: #{separable_conv2d.1} parent=5 // pred_check
        _
      $region42: #{separable_conv2d.1} parent=5 // pred_check_branch
        %259 = sbr.rel (%p256) target = $region44
      $region43: #{separable_conv2d.1} parent=5 // pred_region
        %s260 = ssub.s32 %s19, 1
        %s261 = sand.u32 %s32, 1
        %s262 = scalar_lea.sflag [#allocation3], %s261
        %s263 = sand.u32 %s32, 1
        %s264 = smul.addr %s263, 256
        %s265 = scalar_lea.vmem [#allocation2], %s264
        // Predicated region
        $region45: #{separable_conv2d.1} parent=43 // pred_check
          %p266 = pneg %p45
        $region46: #{separable_conv2d.1} parent=43 // pred_check_branch
          %268 = sbr.rel (%p266) target = $region48
        $region47: #{separable_conv2d.1} parent=43 // pred_region
          %270 = dma.done %s262, 4096
        $region48: #{separable_conv2d.1} parent=43 // pred_fallthru
          _
        // Predicated region
        $region49: #{separable_conv2d.1} parent=43 // pred_check
          %p271 = pneg %p66
        $region50: #{separable_conv2d.1} parent=43 // pred_check_branch
          %273 = sbr.rel (%p271) target = $region52
        $region51: #{separable_conv2d.1} parent=43 // pred_region
          %275 = dma.done [#allocation6], 256
        $region52: #{separable_conv2d.1} parent=43 // pred_fallthru
          _
        // Predicated region
        $region53: #{separable_conv2d.1} parent=43 // pred_check
          %p276 = pneg %p129
        $region54: #{separable_conv2d.1} parent=43 // pred_check_branch
          %278 = sbr.rel (%p276) target = $region56
        $region55: #{separable_conv2d.1} parent=43 // pred_region
          %280 = dma.done [#allocation6], 256
        $region56: #{separable_conv2d.1} parent=43 // pred_fallthru
          _
        %s281 = sand.u32 %s32, 1
        %s282 = scalar_lea.sflag [#allocation3], %s281
        %s283 = sand.u32 %s32, 1
        %s284 = smul.addr %s283, 256
        %s285 = scalar_lea.vmem [#allocation2], %s284
        %p286 = pneg %p45
        %p287 = pneg %p42
        %p288 = pneg %p66
        %p289 = pneg %p63
        %p290 = pneg %p87
        %p291 = pneg %p84
        %p292 = pneg %p108
        %p293 = pneg %p105
        %p294 = pneg %p129
        %p295 = pneg %p126
        %p296 = pneg %p150
        %p297 = pneg %p147
        %p298 = pneg %p176
        %p299 = pneg %p173
        %s300 = sand.u32 %s163, 1
        %s301 = scalar_lea.sflag [#allocation4], %s300
        %s302 = sand.u32 %s163, 1
        %s303 = smul.addr %s302, 256
        %s304 = scalar_lea.vmem [#allocation8], %s303
        %v306 = vld [vmem:[%s265] sm:$0xff]
        %v307 = vld [vmem:[%s265 + $0x8] sm:$0xff]
        %v308 = vld [vmem:[%s265 + $0x10] sm:$0xff]
        %v309 = vld [vmem:[%s265 + $0x18] sm:$0xff]
        %v310 = vld [vmem:[%s265 + $0x20] sm:$0xff]
        %v311 = vld [vmem:[%s265 + $0x28] sm:$0xff]
        %v312 = vld [vmem:[%s265 + $0x30] sm:$0xff]
        %v313 = vld [vmem:[%s265 + $0x38] sm:$0xff]
        %v314 = vld [vmem:[%s265 + $0x40] sm:$0xff]
        %v315 = vld [vmem:[%s265 + $0x48] sm:$0xff]
        %v316 = vld [vmem:[%s265 + $0x50] sm:$0xff]
        %v317 = vld [vmem:[%s265 + $0x58] sm:$0xff]
        %v318 = vld [vmem:[%s265 + $0x60] sm:$0xff]
        %v319 = vld [vmem:[%s265 + $0x68] sm:$0xff]
        %v320 = vld [vmem:[%s265 + $0x70] sm:$0xff]
        %v321 = vld [vmem:[%s265 + $0x78] sm:$0xff]
        %v322 = vld [vmem:[%s265 + $0x80] sm:$0xff]
        %v323 = vld [vmem:[%s265 + $0x88] sm:$0xff]
        %v324 = vld [vmem:[%s265 + $0x90] sm:$0xff]
        %v325 = vld [vmem:[%s265 + $0x98] sm:$0xff]
        %v326 = vld [vmem:[%s265 + $0xa0] sm:$0xff]
        %v327 = vld [vmem:[%s265 + $0xa8] sm:$0xff]
        %v328 = vld [vmem:[%s265 + $0xb0] sm:$0xff]
        %v329 = vld [vmem:[%s265 + $0xb8] sm:$0xff]
        %v330 = vld [vmem:[%s265 + $0xc0] sm:$0xff]
        %v331 = vld [vmem:[%s265 + $0xc8] sm:$0xff]
        %v332 = vld [vmem:[%s265 + $0xd0] sm:$0xff]
        %v333 = vld [vmem:[%s265 + $0xd8] sm:$0xff]
        %v334 = vld [vmem:[%s265 + $0xe0] sm:$0xff]
        %v335 = vld [vmem:[%s265 + $0xe8] sm:$0xff]
        %v336 = vld [vmem:[%s265 + $0xf0] sm:$0xff]
        %v337 = vld [vmem:[%s265 + $0xf8] sm:$0xff]
        %v338 = vld [vmem:[#allocation5] sm:$0xff]
        %v339 = vld [vmem:[#allocation5 + $0x8] sm:$0x1]
        %v340 = vlaneseq
        %v341 = vshrl.u32 %v340, 7
        %v342 = vadd.s32 %v341, 8
        %v359 = vrot.slane 0.0, 7
        %v360 = vrot.slane %v307, 7
        %v361 = vrot.slane %v309, 7
        %v362 = vrot.slane %v311, 7
        %v363 = vrot.slane %v313, 7
        %v364 = vrot.slane %v315, 7
        %v365 = vrot.slane %v317, 7
        %v366 = vrot.slane %v319, 7
        %v367 = vrot.slane %v321, 7
        %v368 = vrot.slane %v323, 7
        %v369 = vrot.slane %v325, 7
        %v370 = vrot.slane %v327, 7
        %v371 = vrot.slane %v329, 7
        %v372 = vrot.slane %v331, 7
        %v373 = vrot.slane %v333, 7
        %v374 = vrot.slane %v335, 7
        %vm406 = vcmask 1040384
        %v407 = vsel %vm406, %v359, %v359
        %v408 = vrot.slane %v306, 7
        %v409 = vsel %vm406, %v408, %v360
        %v410 = vrot.slane %v308, 7
        %v411 = vsel %vm406, %v410, %v361
        %v412 = vrot.slane %v310, 7
        %v413 = vsel %vm406, %v412, %v362
        %v414 = vrot.slane %v312, 7
        %v415 = vsel %vm406, %v414, %v363
        %v416 = vrot.slane %v314, 7
        %v417 = vsel %vm406, %v416, %v364
        %v418 = vrot.slane %v316, 7
        %v419 = vsel %vm406, %v418, %v365
        %v420 = vrot.slane %v318, 7
        %v421 = vsel %vm406, %v420, %v366
        %v422 = vrot.slane %v320, 7
        %v423 = vsel %vm406, %v422, %v367
        %v424 = vrot.slane %v322, 7
        %v425 = vsel %vm406, %v424, %v368
        %v426 = vrot.slane %v324, 7
        %v427 = vsel %vm406, %v426, %v369
        %v428 = vrot.slane %v326, 7
        %v429 = vsel %vm406, %v428, %v370
        %v430 = vrot.slane %v328, 7
        %v431 = vsel %vm406, %v430, %v371
        %v432 = vrot.slane %v330, 7
        %v433 = vsel %vm406, %v432, %v372
        %v434 = vrot.slane %v332, 7
        %v435 = vsel %vm406, %v434, %v373
        %v436 = vrot.slane %v334, 7
        %v437 = vsel %vm406, %v436, %v374
        %v469 = vsel %vm406, %v359, %v359
        %v470 = vsel %vm406, %v360, %v408
        %v471 = vsel %vm406, %v361, %v410
        %v472 = vsel %vm406, %v362, %v412
        %v473 = vsel %vm406, %v363, %v414
        %v474 = vsel %vm406, %v364, %v416
        %v475 = vsel %vm406, %v365, %v418
        %v476 = vsel %vm406, %v366, %v420
        %v477 = vsel %vm406, %v367, %v422
        %v478 = vsel %vm406, %v368, %v424
        %v479 = vsel %vm406, %v369, %v426
        %v480 = vsel %vm406, %v370, %v428
        %v481 = vsel %vm406, %v371, %v430
        %v482 = vsel %vm406, %v372, %v432
        %v483 = vsel %vm406, %v373, %v434
        %v484 = vsel %vm406, %v374, %v436
        %v485 = vadd.s32 %v341, 4294967295
        %v486 = vadd.s32 %v342, 4294967295
        %vm487 = vcmp.ge.s32.totalorder %v485, 0
        %vm488 = vcmp.ge.s32.totalorder %v486, 0
        %vm489 = vcmp.lt.s32.totalorder %v485, 16
        %vm490 = vcmp.lt.s32.totalorder %v486, 16
        %vm491 = vmand %vm487, %vm489
        %vm492 = vmand %vm488, %vm490
        %v493 = vsel %vm491, 1, 0
        %v494 = vsel %vm492, 1, 0
        %vm495 = vcmp.eq.s32.totalorder %v493, 1
        %vm496 = vcmp.eq.s32.totalorder %v494, 1
        %v497 = vsel %vm495, %v469, 0.0
        %v498 = vsel %vm496, %v407, 0.0
        %v499 = vsel %vm495, %v470, 0.0
        %v500 = vsel %vm496, %v409, 0.0
        %v501 = vsel %vm495, %v471, 0.0
        %v502 = vsel %vm496, %v411, 0.0
        %v503 = vsel %vm495, %v472, 0.0
        %v504 = vsel %vm496, %v413, 0.0
        %v505 = vsel %vm495, %v473, 0.0
        %v506 = vsel %vm496, %v415, 0.0
        %v507 = vsel %vm495, %v474, 0.0
        %v508 = vsel %vm496, %v417, 0.0
        %v509 = vsel %vm495, %v475, 0.0
        %v510 = vsel %vm496, %v419, 0.0
        %v511 = vsel %vm495, %v476, 0.0
        %v512 = vsel %vm496, %v421, 0.0
        %v513 = vsel %vm495, %v477, 0.0
        %v514 = vsel %vm496, %v423, 0.0
        %v515 = vsel %vm495, %v478, 0.0
        %v516 = vsel %vm496, %v425, 0.0
        %v517 = vsel %vm495, %v479, 0.0
        %v518 = vsel %vm496, %v427, 0.0
        %v519 = vsel %vm495, %v480, 0.0
        %v520 = vsel %vm496, %v429, 0.0
        %v521 = vsel %vm495, %v481, 0.0
        %v522 = vsel %vm496, %v431, 0.0
        %v523 = vsel %vm495, %v482, 0.0
        %v524 = vsel %vm496, %v433, 0.0
        %v525 = vsel %vm495, %v483, 0.0
        %v526 = vsel %vm496, %v435, 0.0
        %v527 = vsel %vm495, %v484, 0.0
        %v528 = vsel %vm496, %v437, 0.0
        %v529 = vperm.slane %v338, 0
        %v530 = vmul.f32 %v497, %v529
        %v531 = vmul.f32 %v498, %v529
        %v532 = vmul.f32 %v499, %v529
        %v533 = vmul.f32 %v500, %v529
        %v534 = vmul.f32 %v501, %v529
        %v535 = vmul.f32 %v502, %v529
        %v536 = vmul.f32 %v503, %v529
        %v537 = vmul.f32 %v504, %v529
        %v538 = vmul.f32 %v505, %v529
        %v539 = vmul.f32 %v506, %v529
        %v540 = vmul.f32 %v507, %v529
        %v541 = vmul.f32 %v508, %v529
        %v542 = vmul.f32 %v509, %v529
        %v543 = vmul.f32 %v510, %v529
        %v544 = vmul.f32 %v511, %v529
        %v545 = vmul.f32 %v512, %v529
        %v546 = vmul.f32 %v513, %v529
        %v547 = vmul.f32 %v514, %v529
        %v548 = vmul.f32 %v515, %v529
        %v549 = vmul.f32 %v516, %v529
        %v550 = vmul.f32 %v517, %v529
        %v551 = vmul.f32 %v518, %v529
        %v552 = vmul.f32 %v519, %v529
        %v553 = vmul.f32 %v520, %v529
        %v554 = vmul.f32 %v521, %v529
        %v555 = vmul.f32 %v522, %v529
        %v556 = vmul.f32 %v523, %v529
        %v557 = vmul.f32 %v524, %v529
        %v558 = vmul.f32 %v525, %v529
        %v559 = vmul.f32 %v526, %v529
        %v560 = vmul.f32 %v527, %v529
        %v561 = vmul.f32 %v528, %v529
        %v562 = vadd.f32 %v530, 0.0
        %v563 = vadd.f32 %v531, 0.0
        %v564 = vadd.f32 %v532, 0.0
        %v565 = vadd.f32 %v533, 0.0
        %v566 = vadd.f32 %v534, 0.0
        %v567 = vadd.f32 %v535, 0.0
        %v568 = vadd.f32 %v536, 0.0
        %v569 = vadd.f32 %v537, 0.0
        %v570 = vadd.f32 %v538, 0.0
        %v571 = vadd.f32 %v539, 0.0
        %v572 = vadd.f32 %v540, 0.0
        %v573 = vadd.f32 %v541, 0.0
        %v574 = vadd.f32 %v542, 0.0
        %v575 = vadd.f32 %v543, 0.0
        %v576 = vadd.f32 %v544, 0.0
        %v577 = vadd.f32 %v545, 0.0
        %v578 = vadd.f32 %v546, 0.0
        %v579 = vadd.f32 %v547, 0.0
        %v580 = vadd.f32 %v548, 0.0
        %v581 = vadd.f32 %v549, 0.0
        %v582 = vadd.f32 %v550, 0.0
        %v583 = vadd.f32 %v551, 0.0
        %v584 = vadd.f32 %v552, 0.0
        %v585 = vadd.f32 %v553, 0.0
        %v586 = vadd.f32 %v554, 0.0
        %v587 = vadd.f32 %v555, 0.0
        %v588 = vadd.f32 %v556, 0.0
        %v589 = vadd.f32 %v557, 0.0
        %v590 = vadd.f32 %v558, 0.0
        %v591 = vadd.f32 %v559, 0.0
        %v592 = vadd.f32 %v560, 0.0
        %v593 = vadd.f32 %v561, 0.0
        %v594 = vperm.slane %v338, 1
        %v595 = vmul.f32 %v594, 0.0
        %v596 = vmul.f32 %v306, %v594
        %v597 = vmul.f32 %v307, %v594
        %v598 = vmul.f32 %v308, %v594
        %v599 = vmul.f32 %v309, %v594
        %v600 = vmul.f32 %v310, %v594
        %v601 = vmul.f32 %v311, %v594
        %v602 = vmul.f32 %v312, %v594
        %v603 = vmul.f32 %v313, %v594
        %v604 = vmul.f32 %v314, %v594
        %v605 = vmul.f32 %v315, %v594
        %v606 = vmul.f32 %v316, %v594
        %v607 = vmul.f32 %v317, %v594
        %v608 = vmul.f32 %v318, %v594
        %v609 = vmul.f32 %v319, %v594
        %v610 = vmul.f32 %v320, %v594
        %v611 = vmul.f32 %v321, %v594
        %v612 = vmul.f32 %v322, %v594
        %v613 = vmul.f32 %v323, %v594
        %v614 = vmul.f32 %v324, %v594
        %v615 = vmul.f32 %v325, %v594
        %v616 = vmul.f32 %v326, %v594
        %v617 = vmul.f32 %v327, %v594
        %v618 = vmul.f32 %v328, %v594
        %v619 = vmul.f32 %v329, %v594
        %v620 = vmul.f32 %v330, %v594
        %v621 = vmul.f32 %v331, %v594
        %v622 = vmul.f32 %v332, %v594
        %v623 = vmul.f32 %v333, %v594
        %v624 = vmul.f32 %v334, %v594
        %v625 = vmul.f32 %v335, %v594
        %v626 = vadd.f32 %v562, %v595
        %v627 = vadd.f32 %v563, %v595
        %v628 = vadd.f32 %v564, %v596
        %v629 = vadd.f32 %v565, %v597
        %v630 = vadd.f32 %v566, %v598
        %v631 = vadd.f32 %v567, %v599
        %v632 = vadd.f32 %v568, %v600
        %v633 = vadd.f32 %v569, %v601
        %v634 = vadd.f32 %v570, %v602
        %v635 = vadd.f32 %v571, %v603
        %v636 = vadd.f32 %v572, %v604
        %v637 = vadd.f32 %v573, %v605
        %v638 = vadd.f32 %v574, %v606
        %v639 = vadd.f32 %v575, %v607
        %v640 = vadd.f32 %v576, %v608
        %v641 = vadd.f32 %v577, %v609
        %v642 = vadd.f32 %v578, %v610
        %v643 = vadd.f32 %v579, %v611
        %v644 = vadd.f32 %v580, %v612
        %v645 = vadd.f32 %v581, %v613
        %v646 = vadd.f32 %v582, %v614
        %v647 = vadd.f32 %v583, %v615
        %v648 = vadd.f32 %v584, %v616
        %v649 = vadd.f32 %v585, %v617
        %v650 = vadd.f32 %v586, %v618
        %v651 = vadd.f32 %v587, %v619
        %v652 = vadd.f32 %v588, %v620
        %v653 = vadd.f32 %v589, %v621
        %v654 = vadd.f32 %v590, %v622
        %v655 = vadd.f32 %v591, %v623
        %v656 = vadd.f32 %v592, %v624
        %v657 = vadd.f32 %v593, %v625
        %vm658 = vcmask 1046528
        %v659 = vrot.slane 0.0, 1
        %v660 = vsel %vm658, %v659, %v659
        %v661 = vrot.slane %v306, 1
        %v662 = vrot.slane %v307, 1
        %v663 = vsel %vm658, %v661, %v662
        %v664 = vrot.slane %v308, 1
        %v665 = vrot.slane %v309, 1
        %v666 = vsel %vm658, %v664, %v665
        %v667 = vrot.slane %v310, 1
        %v668 = vrot.slane %v311, 1
        %v669 = vsel %vm658, %v667, %v668
        %v670 = vrot.slane %v312, 1
        %v671 = vrot.slane %v313, 1
        %v672 = vsel %vm658, %v670, %v671
        %v673 = vrot.slane %v314, 1
        %v674 = vrot.slane %v315, 1
        %v675 = vsel %vm658, %v673, %v674
        %v676 = vrot.slane %v316, 1
        %v677 = vrot.slane %v317, 1
        %v678 = vsel %vm658, %v676, %v677
        %v679 = vrot.slane %v318, 1
        %v680 = vrot.slane %v319, 1
        %v681 = vsel %vm658, %v679, %v680
        %v682 = vrot.slane %v320, 1
        %v683 = vrot.slane %v321, 1
        %v684 = vsel %vm658, %v682, %v683
        %v685 = vrot.slane %v322, 1
        %v686 = vrot.slane %v323, 1
        %v687 = vsel %vm658, %v685, %v686
        %v688 = vrot.slane %v324, 1
        %v689 = vrot.slane %v325, 1
        %v690 = vsel %vm658, %v688, %v689
        %v691 = vrot.slane %v326, 1
        %v692 = vrot.slane %v327, 1
        %v693 = vsel %vm658, %v691, %v692
        %v694 = vrot.slane %v328, 1
        %v695 = vrot.slane %v329, 1
        %v696 = vsel %vm658, %v694, %v695
        %v697 = vrot.slane %v330, 1
        %v698 = vrot.slane %v331, 1
        %v699 = vsel %vm658, %v697, %v698
        %v700 = vrot.slane %v332, 1
        %v701 = vrot.slane %v333, 1
        %v702 = vsel %vm658, %v700, %v701
        %v703 = vrot.slane %v334, 1
        %v704 = vrot.slane %v335, 1
        %v705 = vsel %vm658, %v703, %v704
        %v753 = vsel %vm658, %v659, %v659
        %v754 = vsel %vm658, %v662, %v661
        %v755 = vsel %vm658, %v665, %v664
        %v756 = vsel %vm658, %v668, %v667
        %v757 = vsel %vm658, %v671, %v670
        %v758 = vsel %vm658, %v674, %v673
        %v759 = vsel %vm658, %v677, %v676
        %v760 = vsel %vm658, %v680, %v679
        %v761 = vsel %vm658, %v683, %v682
        %v762 = vsel %vm658, %v686, %v685
        %v763 = vsel %vm658, %v689, %v688
        %v764 = vsel %vm658, %v692, %v691
        %v765 = vsel %vm658, %v695, %v694
        %v766 = vsel %vm658, %v698, %v697
        %v767 = vsel %vm658, %v701, %v700
        %v768 = vsel %vm658, %v704, %v703
        %v769 = vadd.s32 %v341, 1
        %v770 = vadd.s32 %v342, 1
        %vm771 = vcmp.ge.s32.totalorder %v769, 0
        %vm772 = vcmp.ge.s32.totalorder %v770, 0
        %vm773 = vcmp.lt.s32.totalorder %v769, 16
        %vm774 = vcmp.lt.s32.totalorder %v770, 16
        %vm775 = vmand %vm771, %vm773
        %vm776 = vmand %vm772, %vm774
        %v777 = vsel %vm775, 1, 0
        %v778 = vsel %vm776, 1, 0
        %vm779 = vcmp.eq.s32.totalorder %v777, 1
        %vm780 = vcmp.eq.s32.totalorder %v778, 1
        %v781 = vsel %vm779, %v660, 0.0
        %v782 = vsel %vm780, %v753, 0.0
        %v783 = vsel %vm779, %v663, 0.0
        %v784 = vsel %vm780, %v754, 0.0
        %v785 = vsel %vm779, %v666, 0.0
        %v786 = vsel %vm780, %v755, 0.0
        %v787 = vsel %vm779, %v669, 0.0
        %v788 = vsel %vm780, %v756, 0.0
        %v789 = vsel %vm779, %v672, 0.0
        %v790 = vsel %vm780, %v757, 0.0
        %v791 = vsel %vm779, %v675, 0.0
        %v792 = vsel %vm780, %v758, 0.0
        %v793 = vsel %vm779, %v678, 0.0
        %v794 = vsel %vm780, %v759, 0.0
        %v795 = vsel %vm779, %v681, 0.0
        %v796 = vsel %vm780, %v760, 0.0
        %v797 = vsel %vm779, %v684, 0.0
        %v798 = vsel %vm780, %v761, 0.0
        %v799 = vsel %vm779, %v687, 0.0
        %v800 = vsel %vm780, %v762, 0.0
        %v801 = vsel %vm779, %v690, 0.0
        %v802 = vsel %vm780, %v763, 0.0
        %v803 = vsel %vm779, %v693, 0.0
        %v804 = vsel %vm780, %v764, 0.0
        %v805 = vsel %vm779, %v696, 0.0
        %v806 = vsel %vm780, %v765, 0.0
        %v807 = vsel %vm779, %v699, 0.0
        %v808 = vsel %vm780, %v766, 0.0
        %v809 = vsel %vm779, %v702, 0.0
        %v810 = vsel %vm780, %v767, 0.0
        %v811 = vsel %vm779, %v705, 0.0
        %v812 = vsel %vm780, %v768, 0.0
        %v813 = vperm.slane %v338, 2
        %v814 = vmul.f32 %v781, %v813
        %v815 = vmul.f32 %v782, %v813
        %v816 = vmul.f32 %v783, %v813
        %v817 = vmul.f32 %v784, %v813
        %v818 = vmul.f32 %v785, %v813
        %v819 = vmul.f32 %v786, %v813
        %v820 = vmul.f32 %v787, %v813
        %v821 = vmul.f32 %v788, %v813
        %v822 = vmul.f32 %v789, %v813
        %v823 = vmul.f32 %v790, %v813
        %v824 = vmul.f32 %v791, %v813
        %v825 = vmul.f32 %v792, %v813
        %v826 = vmul.f32 %v793, %v813
        %v827 = vmul.f32 %v794, %v813
        %v828 = vmul.f32 %v795, %v813
        %v829 = vmul.f32 %v796, %v813
        %v830 = vmul.f32 %v797, %v813
        %v831 = vmul.f32 %v798, %v813
        %v832 = vmul.f32 %v799, %v813
        %v833 = vmul.f32 %v800, %v813
        %v834 = vmul.f32 %v801, %v813
        %v835 = vmul.f32 %v802, %v813
        %v836 = vmul.f32 %v803, %v813
        %v837 = vmul.f32 %v804, %v813
        %v838 = vmul.f32 %v805, %v813
        %v839 = vmul.f32 %v806, %v813
        %v840 = vmul.f32 %v807, %v813
        %v841 = vmul.f32 %v808, %v813
        %v842 = vmul.f32 %v809, %v813
        %v843 = vmul.f32 %v810, %v813
        %v844 = vmul.f32 %v811, %v813
        %v845 = vmul.f32 %v812, %v813
        %v846 = vadd.f32 %v626, %v814
        %v847 = vadd.f32 %v627, %v815
        %v848 = vadd.f32 %v628, %v816
        %v849 = vadd.f32 %v629, %v817
        %v850 = vadd.f32 %v630, %v818
        %v851 = vadd.f32 %v631, %v819
        %v852 = vadd.f32 %v632, %v820
        %v853 = vadd.f32 %v633, %v821
        %v854 = vadd.f32 %v634, %v822
        %v855 = vadd.f32 %v635, %v823
        %v856 = vadd.f32 %v636, %v824
        %v857 = vadd.f32 %v637, %v825
        %v858 = vadd.f32 %v638, %v826
        %v859 = vadd.f32 %v639, %v827
        %v860 = vadd.f32 %v640, %v828
        %v861 = vadd.f32 %v641, %v829
        %v862 = vadd.f32 %v642, %v830
        %v863 = vadd.f32 %v643, %v831
        %v864 = vadd.f32 %v644, %v832
        %v865 = vadd.f32 %v645, %v833
        %v866 = vadd.f32 %v646, %v834
        %v867 = vadd.f32 %v647, %v835
        %v868 = vadd.f32 %v648, %v836
        %v869 = vadd.f32 %v649, %v837
        %v870 = vadd.f32 %v650, %v838
        %v871 = vadd.f32 %v651, %v839
        %v872 = vadd.f32 %v652, %v840
        %v873 = vadd.f32 %v653, %v841
        %v874 = vadd.f32 %v654, %v842
        %v875 = vadd.f32 %v655, %v843
        %v876 = vadd.f32 %v656, %v844
        %v877 = vadd.f32 %v657, %v845
        %v879 = vrot.slane %v337, 7
        %v882 = vrot.slane %v336, 7
        %v883 = vsel %vm406, %v882, %v879
        %v886 = vsel %vm406, %v879, %v882
        %v887 = vsel %vm495, %v886, 0.0
        %v888 = vsel %vm496, %v883, 0.0
        %v889 = vperm.slane %v338, 3
        %v890 = vmul.f32 %v499, %v889
        %v891 = vmul.f32 %v500, %v889
        %v892 = vmul.f32 %v501, %v889
        %v893 = vmul.f32 %v502, %v889
        %v894 = vmul.f32 %v503, %v889
        %v895 = vmul.f32 %v504, %v889
        %v896 = vmul.f32 %v505, %v889
        %v897 = vmul.f32 %v506, %v889
        %v898 = vmul.f32 %v507, %v889
        %v899 = vmul.f32 %v508, %v889
        %v900 = vmul.f32 %v509, %v889
        %v901 = vmul.f32 %v510, %v889
        %v902 = vmul.f32 %v511, %v889
        %v903 = vmul.f32 %v512, %v889
        %v904 = vmul.f32 %v513, %v889
        %v905 = vmul.f32 %v514, %v889
        %v906 = vmul.f32 %v515, %v889
        %v907 = vmul.f32 %v516, %v889
        %v908 = vmul.f32 %v517, %v889
        %v909 = vmul.f32 %v518, %v889
        %v910 = vmul.f32 %v519, %v889
        %v911 = vmul.f32 %v520, %v889
        %v912 = vmul.f32 %v521, %v889
        %v913 = vmul.f32 %v522, %v889
        %v914 = vmul.f32 %v523, %v889
        %v915 = vmul.f32 %v524, %v889
        %v916 = vmul.f32 %v525, %v889
        %v917 = vmul.f32 %v526, %v889
        %v918 = vmul.f32 %v527, %v889
        %v919 = vmul.f32 %v528, %v889
        %v920 = vmul.f32 %v887, %v889
        %v921 = vmul.f32 %v888, %v889
        %v922 = vadd.f32 %v846, %v890
        %v923 = vadd.f32 %v847, %v891
        %v924 = vadd.f32 %v848, %v892
        %v925 = vadd.f32 %v849, %v893
        %v926 = vadd.f32 %v850, %v894
        %v927 = vadd.f32 %v851, %v895
        %v928 = vadd.f32 %v852, %v896
        %v929 = vadd.f32 %v853, %v897
        %v930 = vadd.f32 %v854, %v898
        %v931 = vadd.f32 %v855, %v899
        %v932 = vadd.f32 %v856, %v900
        %v933 = vadd.f32 %v857, %v901
        %v934 = vadd.f32 %v858, %v902
        %v935 = vadd.f32 %v859, %v903
        %v936 = vadd.f32 %v860, %v904
        %v937 = vadd.f32 %v861, %v905
        %v938 = vadd.f32 %v862, %v906
        %v939 = vadd.f32 %v863, %v907
        %v940 = vadd.f32 %v864, %v908
        %v941 = vadd.f32 %v865, %v909
        %v942 = vadd.f32 %v866, %v910
        %v943 = vadd.f32 %v867, %v911
        %v944 = vadd.f32 %v868, %v912
        %v945 = vadd.f32 %v869, %v913
        %v946 = vadd.f32 %v870, %v914
        %v947 = vadd.f32 %v871, %v915
        %v948 = vadd.f32 %v872, %v916
        %v949 = vadd.f32 %v873, %v917
        %v950 = vadd.f32 %v874, %v918
        %v951 = vadd.f32 %v875, %v919
        %v952 = vadd.f32 %v876, %v920
        %v953 = vadd.f32 %v877, %v921
        %v954 = vperm.slane %v338, 4
        %v955 = vmul.f32 %v306, %v954
        %v956 = vmul.f32 %v307, %v954
        %v957 = vmul.f32 %v308, %v954
        %v958 = vmul.f32 %v309, %v954
        %v959 = vmul.f32 %v310, %v954
        %v960 = vmul.f32 %v311, %v954
        %v961 = vmul.f32 %v312, %v954
        %v962 = vmul.f32 %v313, %v954
        %v963 = vmul.f32 %v314, %v954
        %v964 = vmul.f32 %v315, %v954
        %v965 = vmul.f32 %v316, %v954
        %v966 = vmul.f32 %v317, %v954
        %v967 = vmul.f32 %v318, %v954
        %v968 = vmul.f32 %v319, %v954
        %v969 = vmul.f32 %v320, %v954
        %v970 = vmul.f32 %v321, %v954
        %v971 = vmul.f32 %v322, %v954
        %v972 = vmul.f32 %v323, %v954
        %v973 = vmul.f32 %v324, %v954
        %v974 = vmul.f32 %v325, %v954
        %v975 = vmul.f32 %v326, %v954
        %v976 = vmul.f32 %v327, %v954
        %v977 = vmul.f32 %v328, %v954
        %v978 = vmul.f32 %v329, %v954
        %v979 = vmul.f32 %v330, %v954
        %v980 = vmul.f32 %v331, %v954
        %v981 = vmul.f32 %v332, %v954
        %v982 = vmul.f32 %v333, %v954
        %v983 = vmul.f32 %v334, %v954
        %v984 = vmul.f32 %v335, %v954
        %v985 = vmul.f32 %v336, %v954
        %v986 = vmul.f32 %v337, %v954
        %v987 = vadd.f32 %v922, %v955
        %v988 = vadd.f32 %v923, %v956
        %v989 = vadd.f32 %v924, %v957
        %v990 = vadd.f32 %v925, %v958
        %v991 = vadd.f32 %v926, %v959
        %v992 = vadd.f32 %v927, %v960
        %v993 = vadd.f32 %v928, %v961
        %v994 = vadd.f32 %v929, %v962
        %v995 = vadd.f32 %v930, %v963
        %v996 = vadd.f32 %v931, %v964
        %v997 = vadd.f32 %v932, %v965
        %v998 = vadd.f32 %v933, %v966
        %v999 = vadd.f32 %v934, %v967
        %v1000 = vadd.f32 %v935, %v968
        %v1001 = vadd.f32 %v936, %v969
        %v1002 = vadd.f32 %v937, %v970
        %v1003 = vadd.f32 %v938, %v971
        %v1004 = vadd.f32 %v939, %v972
        %v1005 = vadd.f32 %v940, %v973
        %v1006 = vadd.f32 %v941, %v974
        %v1007 = vadd.f32 %v942, %v975
        %v1008 = vadd.f32 %v943, %v976
        %v1009 = vadd.f32 %v944, %v977
        %v1010 = vadd.f32 %v945, %v978
        %v1011 = vadd.f32 %v946, %v979
        %v1012 = vadd.f32 %v947, %v980
        %v1013 = vadd.f32 %v948, %v981
        %v1014 = vadd.f32 %v949, %v982
        %v1015 = vadd.f32 %v950, %v983
        %v1016 = vadd.f32 %v951, %v984
        %v1017 = vadd.f32 %v952, %v985
        %v1018 = vadd.f32 %v953, %v986
        %v1019 = vrot.slane %v336, 1
        %v1020 = vrot.slane %v337, 1
        %v1021 = vsel %vm658, %v1019, %v1020
        %v1025 = vsel %vm658, %v1020, %v1019
        %v1026 = vsel %vm779, %v1021, 0.0
        %v1027 = vsel %vm780, %v1025, 0.0
        %v1028 = vperm.slane %v338, 5
        %v1029 = vmul.f32 %v783, %v1028
        %v1030 = vmul.f32 %v784, %v1028
        %v1031 = vmul.f32 %v785, %v1028
        %v1032 = vmul.f32 %v786, %v1028
        %v1033 = vmul.f32 %v787, %v1028
        %v1034 = vmul.f32 %v788, %v1028
        %v1035 = vmul.f32 %v789, %v1028
        %v1036 = vmul.f32 %v790, %v1028
        %v1037 = vmul.f32 %v791, %v1028
        %v1038 = vmul.f32 %v792, %v1028
        %v1039 = vmul.f32 %v793, %v1028
        %v1040 = vmul.f32 %v794, %v1028
        %v1041 = vmul.f32 %v795, %v1028
        %v1042 = vmul.f32 %v796, %v1028
        %v1043 = vmul.f32 %v797, %v1028
        %v1044 = vmul.f32 %v798, %v1028
        %v1045 = vmul.f32 %v799, %v1028
        %v1046 = vmul.f32 %v800, %v1028
        %v1047 = vmul.f32 %v801, %v1028
        %v1048 = vmul.f32 %v802, %v1028
        %v1049 = vmul.f32 %v803, %v1028
        %v1050 = vmul.f32 %v804, %v1028
        %v1051 = vmul.f32 %v805, %v1028
        %v1052 = vmul.f32 %v806, %v1028
        %v1053 = vmul.f32 %v807, %v1028
        %v1054 = vmul.f32 %v808, %v1028
        %v1055 = vmul.f32 %v809, %v1028
        %v1056 = vmul.f32 %v810, %v1028
        %v1057 = vmul.f32 %v811, %v1028
        %v1058 = vmul.f32 %v812, %v1028
        %v1059 = vmul.f32 %v1026, %v1028
        %v1060 = vmul.f32 %v1027, %v1028
        %v1061 = vadd.f32 %v987, %v1029
        %v1062 = vadd.f32 %v988, %v1030
        %v1063 = vadd.f32 %v989, %v1031
        %v1064 = vadd.f32 %v990, %v1032
        %v1065 = vadd.f32 %v991, %v1033
        %v1066 = vadd.f32 %v992, %v1034
        %v1067 = vadd.f32 %v993, %v1035
        %v1068 = vadd.f32 %v994, %v1036
        %v1069 = vadd.f32 %v995, %v1037
        %v1070 = vadd.f32 %v996, %v1038
        %v1071 = vadd.f32 %v997, %v1039
        %v1072 = vadd.f32 %v998, %v1040
        %v1073 = vadd.f32 %v999, %v1041
        %v1074 = vadd.f32 %v1000, %v1042
        %v1075 = vadd.f32 %v1001, %v1043
        %v1076 = vadd.f32 %v1002, %v1044
        %v1077 = vadd.f32 %v1003, %v1045
        %v1078 = vadd.f32 %v1004, %v1046
        %v1079 = vadd.f32 %v1005, %v1047
        %v1080 = vadd.f32 %v1006, %v1048
        %v1081 = vadd.f32 %v1007, %v1049
        %v1082 = vadd.f32 %v1008, %v1050
        %v1083 = vadd.f32 %v1009, %v1051
        %v1084 = vadd.f32 %v1010, %v1052
        %v1085 = vadd.f32 %v1011, %v1053
        %v1086 = vadd.f32 %v1012, %v1054
        %v1087 = vadd.f32 %v1013, %v1055
        %v1088 = vadd.f32 %v1014, %v1056
        %v1089 = vadd.f32 %v1015, %v1057
        %v1090 = vadd.f32 %v1016, %v1058
        %v1091 = vadd.f32 %v1017, %v1059
        %v1092 = vadd.f32 %v1018, %v1060
        %v1093 = vperm.slane %v338, 6
        %v1094 = vmul.f32 %v501, %v1093
        %v1095 = vmul.f32 %v502, %v1093
        %v1096 = vmul.f32 %v503, %v1093
        %v1097 = vmul.f32 %v504, %v1093
        %v1098 = vmul.f32 %v505, %v1093
        %v1099 = vmul.f32 %v506, %v1093
        %v1100 = vmul.f32 %v507, %v1093
        %v1101 = vmul.f32 %v508, %v1093
        %v1102 = vmul.f32 %v509, %v1093
        %v1103 = vmul.f32 %v510, %v1093
        %v1104 = vmul.f32 %v511, %v1093
        %v1105 = vmul.f32 %v512, %v1093
        %v1106 = vmul.f32 %v513, %v1093
        %v1107 = vmul.f32 %v514, %v1093
        %v1108 = vmul.f32 %v515, %v1093
        %v1109 = vmul.f32 %v516, %v1093
        %v1110 = vmul.f32 %v517, %v1093
        %v1111 = vmul.f32 %v518, %v1093
        %v1112 = vmul.f32 %v519, %v1093
        %v1113 = vmul.f32 %v520, %v1093
        %v1114 = vmul.f32 %v521, %v1093
        %v1115 = vmul.f32 %v522, %v1093
        %v1116 = vmul.f32 %v523, %v1093
        %v1117 = vmul.f32 %v524, %v1093
        %v1118 = vmul.f32 %v525, %v1093
        %v1119 = vmul.f32 %v526, %v1093
        %v1120 = vmul.f32 %v527, %v1093
        %v1121 = vmul.f32 %v528, %v1093
        %v1122 = vmul.f32 %v887, %v1093
        %v1123 = vmul.f32 %v888, %v1093
        %v1124 = vmul.f32 %v497, %v1093
        %v1125 = vmul.f32 %v498, %v1093
        %v1126 = vadd.f32 %v1061, %v1094
        %v1127 = vadd.f32 %v1062, %v1095
        %v1128 = vadd.f32 %v1063, %v1096
        %v1129 = vadd.f32 %v1064, %v1097
        %v1130 = vadd.f32 %v1065, %v1098
        %v1131 = vadd.f32 %v1066, %v1099
        %v1132 = vadd.f32 %v1067, %v1100
        %v1133 = vadd.f32 %v1068, %v1101
        %v1134 = vadd.f32 %v1069, %v1102
        %v1135 = vadd.f32 %v1070, %v1103
        %v1136 = vadd.f32 %v1071, %v1104
        %v1137 = vadd.f32 %v1072, %v1105
        %v1138 = vadd.f32 %v1073, %v1106
        %v1139 = vadd.f32 %v1074, %v1107
        %v1140 = vadd.f32 %v1075, %v1108
        %v1141 = vadd.f32 %v1076, %v1109
        %v1142 = vadd.f32 %v1077, %v1110
        %v1143 = vadd.f32 %v1078, %v1111
        %v1144 = vadd.f32 %v1079, %v1112
        %v1145 = vadd.f32 %v1080, %v1113
        %v1146 = vadd.f32 %v1081, %v1114
        %v1147 = vadd.f32 %v1082, %v1115
        %v1148 = vadd.f32 %v1083, %v1116
        %v1149 = vadd.f32 %v1084, %v1117
        %v1150 = vadd.f32 %v1085, %v1118
        %v1151 = vadd.f32 %v1086, %v1119
        %v1152 = vadd.f32 %v1087, %v1120
        %v1153 = vadd.f32 %v1088, %v1121
        %v1154 = vadd.f32 %v1089, %v1122
        %v1155 = vadd.f32 %v1090, %v1123
        %v1156 = vadd.f32 %v1091, %v1124
        %v1157 = vadd.f32 %v1092, %v1125
        %v1158 = vperm.slane %v338, 7
        %v1159 = vmul.f32 %v308, %v1158
        %v1160 = vmul.f32 %v309, %v1158
        %v1161 = vmul.f32 %v310, %v1158
        %v1162 = vmul.f32 %v311, %v1158
        %v1163 = vmul.f32 %v312, %v1158
        %v1164 = vmul.f32 %v313, %v1158
        %v1165 = vmul.f32 %v314, %v1158
        %v1166 = vmul.f32 %v315, %v1158
        %v1167 = vmul.f32 %v316, %v1158
        %v1168 = vmul.f32 %v317, %v1158
        %v1169 = vmul.f32 %v318, %v1158
        %v1170 = vmul.f32 %v319, %v1158
        %v1171 = vmul.f32 %v320, %v1158
        %v1172 = vmul.f32 %v321, %v1158
        %v1173 = vmul.f32 %v322, %v1158
        %v1174 = vmul.f32 %v323, %v1158
        %v1175 = vmul.f32 %v324, %v1158
        %v1176 = vmul.f32 %v325, %v1158
        %v1177 = vmul.f32 %v326, %v1158
        %v1178 = vmul.f32 %v327, %v1158
        %v1179 = vmul.f32 %v328, %v1158
        %v1180 = vmul.f32 %v329, %v1158
        %v1181 = vmul.f32 %v330, %v1158
        %v1182 = vmul.f32 %v331, %v1158
        %v1183 = vmul.f32 %v332, %v1158
        %v1184 = vmul.f32 %v333, %v1158
        %v1185 = vmul.f32 %v334, %v1158
        %v1186 = vmul.f32 %v335, %v1158
        %v1187 = vmul.f32 %v336, %v1158
        %v1188 = vmul.f32 %v337, %v1158
        %v1189 = vmul.f32 %v1158, 0.0
        %v1190 = vadd.f32 %v1126, %v1159
        %v1191 = vadd.f32 %v1127, %v1160
        %v1192 = vadd.f32 %v1128, %v1161
        %v1193 = vadd.f32 %v1129, %v1162
        %v1194 = vadd.f32 %v1130, %v1163
        %v1195 = vadd.f32 %v1131, %v1164
        %v1196 = vadd.f32 %v1132, %v1165
        %v1197 = vadd.f32 %v1133, %v1166
        %v1198 = vadd.f32 %v1134, %v1167
        %v1199 = vadd.f32 %v1135, %v1168
        %v1200 = vadd.f32 %v1136, %v1169
        %v1201 = vadd.f32 %v1137, %v1170
        %v1202 = vadd.f32 %v1138, %v1171
        %v1203 = vadd.f32 %v1139, %v1172
        %v1204 = vadd.f32 %v1140, %v1173
        %v1205 = vadd.f32 %v1141, %v1174
        %v1206 = vadd.f32 %v1142, %v1175
        %v1207 = vadd.f32 %v1143, %v1176
        %v1208 = vadd.f32 %v1144, %v1177
        %v1209 = vadd.f32 %v1145, %v1178
        %v1210 = vadd.f32 %v1146, %v1179
        %v1211 = vadd.f32 %v1147, %v1180
        %v1212 = vadd.f32 %v1148, %v1181
        %v1213 = vadd.f32 %v1149, %v1182
        %v1214 = vadd.f32 %v1150, %v1183
        %v1215 = vadd.f32 %v1151, %v1184
        %v1216 = vadd.f32 %v1152, %v1185
        %v1217 = vadd.f32 %v1153, %v1186
        %v1218 = vadd.f32 %v1154, %v1187
        %v1219 = vadd.f32 %v1155, %v1188
        %v1220 = vadd.f32 %v1156, %v1189
        %v1221 = vadd.f32 %v1157, %v1189
        %v1222 = vperm.slane %v339, 0
        %v1223 = vmul.f32 %v785, %v1222
        %v1224 = vmul.f32 %v786, %v1222
        %v1225 = vmul.f32 %v787, %v1222
        %v1226 = vmul.f32 %v788, %v1222
        %v1227 = vmul.f32 %v789, %v1222
        %v1228 = vmul.f32 %v790, %v1222
        %v1229 = vmul.f32 %v791, %v1222
        %v1230 = vmul.f32 %v792, %v1222
        %v1231 = vmul.f32 %v793, %v1222
        %v1232 = vmul.f32 %v794, %v1222
        %v1233 = vmul.f32 %v795, %v1222
        %v1234 = vmul.f32 %v796, %v1222
        %v1235 = vmul.f32 %v797, %v1222
        %v1236 = vmul.f32 %v798, %v1222
        %v1237 = vmul.f32 %v799, %v1222
        %v1238 = vmul.f32 %v800, %v1222
        %v1239 = vmul.f32 %v801, %v1222
        %v1240 = vmul.f32 %v802, %v1222
        %v1241 = vmul.f32 %v803, %v1222
        %v1242 = vmul.f32 %v804, %v1222
        %v1243 = vmul.f32 %v805, %v1222
        %v1244 = vmul.f32 %v806, %v1222
        %v1245 = vmul.f32 %v807, %v1222
        %v1246 = vmul.f32 %v808, %v1222
        %v1247 = vmul.f32 %v809, %v1222
        %v1248 = vmul.f32 %v810, %v1222
        %v1249 = vmul.f32 %v811, %v1222
        %v1250 = vmul.f32 %v812, %v1222
        %v1251 = vmul.f32 %v1026, %v1222
        %v1252 = vmul.f32 %v1027, %v1222
        %v1253 = vmul.f32 %v781, %v1222
        %v1254 = vmul.f32 %v782, %v1222
        %v1255 = vadd.f32 %v1190, %v1223
        %v1256 = vadd.f32 %v1191, %v1224
        %v1257 = vadd.f32 %v1192, %v1225
        %v1258 = vadd.f32 %v1193, %v1226
        %v1259 = vadd.f32 %v1194, %v1227
        %v1260 = vadd.f32 %v1195, %v1228
        %v1261 = vadd.f32 %v1196, %v1229
        %v1262 = vadd.f32 %v1197, %v1230
        %v1263 = vadd.f32 %v1198, %v1231
        %v1264 = vadd.f32 %v1199, %v1232
        %v1265 = vadd.f32 %v1200, %v1233
        %v1266 = vadd.f32 %v1201, %v1234
        %v1267 = vadd.f32 %v1202, %v1235
        %v1268 = vadd.f32 %v1203, %v1236
        %v1269 = vadd.f32 %v1204, %v1237
        %v1270 = vadd.f32 %v1205, %v1238
        %v1271 = vadd.f32 %v1206, %v1239
        %v1272 = vadd.f32 %v1207, %v1240
        %v1273 = vadd.f32 %v1208, %v1241
        %v1274 = vadd.f32 %v1209, %v1242
        %v1275 = vadd.f32 %v1210, %v1243
        %v1276 = vadd.f32 %v1211, %v1244
        %v1277 = vadd.f32 %v1212, %v1245
        %v1278 = vadd.f32 %v1213, %v1246
        %v1279 = vadd.f32 %v1214, %v1247
        %v1280 = vadd.f32 %v1215, %v1248
        %v1281 = vadd.f32 %v1216, %v1249
        %v1282 = vadd.f32 %v1217, %v1250
        %v1283 = vadd.f32 %v1218, %v1251
        %v1284 = vadd.f32 %v1219, %v1252
        %v1285 = vadd.f32 %v1220, %v1253
        %v1286 = vadd.f32 %v1221, %v1254
        %v1287 = vld [vmem:[%s2] sm:$0x1]
        %v1289 = vperm.slane %v1287, 0
        %v1291 = vmul.f32 %v1255, %v1289
        %v1292 = vmul.f32 %v1256, %v1289
        %v1293 = vmul.f32 %v1257, %v1289
        %v1294 = vmul.f32 %v1258, %v1289
        %v1295 = vmul.f32 %v1259, %v1289
        %v1296 = vmul.f32 %v1260, %v1289
        %v1297 = vmul.f32 %v1261, %v1289
        %v1298 = vmul.f32 %v1262, %v1289
        %v1299 = vmul.f32 %v1263, %v1289
        %v1300 = vmul.f32 %v1264, %v1289
        %v1301 = vmul.f32 %v1265, %v1289
        %v1302 = vmul.f32 %v1266, %v1289
        %v1303 = vmul.f32 %v1267, %v1289
        %v1304 = vmul.f32 %v1268, %v1289
        %v1305 = vmul.f32 %v1269, %v1289
        %v1306 = vmul.f32 %v1270, %v1289
        %v1307 = vmul.f32 %v1271, %v1289
        %v1308 = vmul.f32 %v1272, %v1289
        %v1309 = vmul.f32 %v1273, %v1289
        %v1310 = vmul.f32 %v1274, %v1289
        %v1311 = vmul.f32 %v1275, %v1289
        %v1312 = vmul.f32 %v1276, %v1289
        %v1313 = vmul.f32 %v1277, %v1289
        %v1314 = vmul.f32 %v1278, %v1289
        %v1315 = vmul.f32 %v1279, %v1289
        %v1316 = vmul.f32 %v1280, %v1289
        %v1317 = vmul.f32 %v1281, %v1289
        %v1318 = vmul.f32 %v1282, %v1289
        %v1319 = vmul.f32 %v1283, %v1289
        %v1320 = vmul.f32 %v1284, %v1289
        %v1321 = vmul.f32 %v1285, %v1289
        %v1322 = vmul.f32 %v1286, %v1289
        %v1323 = vld [vmem:[%s3] sm:$0x1]
        %v1325 = vperm.slane %v1323, 0
        %v1327 = vadd.f32 %v1291, %v1325
        %v1328 = vadd.f32 %v1292, %v1325
        %v1329 = vadd.f32 %v1293, %v1325
        %v1330 = vadd.f32 %v1294, %v1325
        %v1331 = vadd.f32 %v1295, %v1325
        %v1332 = vadd.f32 %v1296, %v1325
        %v1333 = vadd.f32 %v1297, %v1325
        %v1334 = vadd.f32 %v1298, %v1325
        %v1335 = vadd.f32 %v1299, %v1325
        %v1336 = vadd.f32 %v1300, %v1325
        %v1337 = vadd.f32 %v1301, %v1325
        %v1338 = vadd.f32 %v1302, %v1325
        %v1339 = vadd.f32 %v1303, %v1325
        %v1340 = vadd.f32 %v1304, %v1325
        %v1341 = vadd.f32 %v1305, %v1325
        %v1342 = vadd.f32 %v1306, %v1325
        %v1343 = vadd.f32 %v1307, %v1325
        %v1344 = vadd.f32 %v1308, %v1325
        %v1345 = vadd.f32 %v1309, %v1325
        %v1346 = vadd.f32 %v1310, %v1325
        %v1347 = vadd.f32 %v1311, %v1325
        %v1348 = vadd.f32 %v1312, %v1325
        %v1349 = vadd.f32 %v1313, %v1325
        %v1350 = vadd.f32 %v1314, %v1325
        %v1351 = vadd.f32 %v1315, %v1325
        %v1352 = vadd.f32 %v1316, %v1325
        %v1353 = vadd.f32 %v1317, %v1325
        %v1354 = vadd.f32 %v1318, %v1325
        %v1355 = vadd.f32 %v1319, %v1325
        %v1356 = vadd.f32 %v1320, %v1325
        %v1357 = vadd.f32 %v1321, %v1325
        %v1358 = vadd.f32 %v1322, %v1325
        %v1359 = vpack.c.bf16 %v1328, %v1327
        %v1360 = vpack.c.bf16 %v1330, %v1329
        %v1361 = vpack.c.bf16 %v1332, %v1331
        %v1362 = vpack.c.bf16 %v1334, %v1333
        %v1363 = vpack.c.bf16 %v1336, %v1335
        %v1364 = vpack.c.bf16 %v1338, %v1337
        %v1365 = vpack.c.bf16 %v1340, %v1339
        %v1366 = vpack.c.bf16 %v1342, %v1341
        %v1367 = vpack.c.bf16 %v1344, %v1343
        %v1368 = vpack.c.bf16 %v1346, %v1345
        %v1369 = vpack.c.bf16 %v1348, %v1347
        %v1370 = vpack.c.bf16 %v1350, %v1349
        %v1371 = vpack.c.bf16 %v1352, %v1351
        %v1372 = vpack.c.bf16 %v1354, %v1353
        %v1373 = vpack.c.bf16 %v1356, %v1355
        %v1374 = vpack.c.bf16 %v1358, %v1357
        %v1375 = vld [vmem:[#allocation7] sm:$0xf]
        %v1376 = vld [vmem:[#allocation7 + $0x4] sm:$0xf]
        %v1377 = vld [vmem:[#allocation7 + $0x8] sm:$0xf]
        %v1378 = vld [vmem:[#allocation7 + $0xc] sm:$0xf]
        %v1383 = vunpack.c.l.b16 %v1375
        %v1384 = vunpack.c.l.b16 %v1376
        %v1385 = vunpack.c.l.b16 %v1377
        %v1386 = vunpack.c.l.b16 %v1378
        %v1387 = vpack.c.b16 %v1384, %v1383
        %v1388 = vpack.c.b16 %v1386, %v1385
        %vm1391 = vcmask 261120
        %v1393 = vsel %vm1391, %v1359, 0
        %v1396 = vsel %vm1391, %v1360, 0
        %v1399 = vsel %vm1391, %v1361, 0
        %v1402 = vsel %vm1391, %v1362, 0
        %v1405 = vsel %vm1391, %v1363, 0
        %v1408 = vsel %vm1391, %v1364, 0
        %v1411 = vsel %vm1391, %v1365, 0
        %v1414 = vsel %vm1391, %v1366, 0
        %v1417 = vsel %vm1391, %v1367, 0
        %v1420 = vsel %vm1391, %v1368, 0
        %v1423 = vsel %vm1391, %v1369, 0
        %v1426 = vsel %vm1391, %v1370, 0
        %v1429 = vsel %vm1391, %v1371, 0
        %v1432 = vsel %vm1391, %v1372, 0
        %v1435 = vsel %vm1391, %v1373, 0
        %v1438 = vsel %vm1391, %v1374, 0
        %1440 = vmatpush.bf16.msra.mxu0 0
        %1441 = vmatpush.bf16.msra.mxu0 0
        %1442 = vmatpush.bf16.msra.mxu0 0
        %1443 = vmatpush.bf16.msra.mxu0 0
        %1444 = vmatpush.bf16.msra.mxu0 0
        %1445 = vmatpush.bf16.msra.mxu0 0
        %1446 = vmatpush.bf16.msra.mxu0 %v1388
        %1447 = vmatpush.bf16.msra.mxu0 %v1387
        %1448 = vmatmul.bf16.gmra.mxu0 %v1393
        %v1449 = vpop.f32.mrf.mxu0
        %v1450 = vadd.f32 0.0, %v1449
        %v1451 = vpop.f32.mrf.mxu0
        %v1452 = vadd.f32 0.0, %v1451
        %1453 = vmatmul.bf16.gmra.mxu0 %v1396
        %v1454 = vpop.f32.mrf.mxu0
        %v1455 = vadd.f32 0.0, %v1454
        %v1456 = vpop.f32.mrf.mxu0
        %v1457 = vadd.f32 0.0, %v1456
        %1458 = vmatmul.bf16.gmra.mxu0 %v1399
        %v1459 = vpop.f32.mrf.mxu0
        %v1460 = vadd.f32 0.0, %v1459
        %v1461 = vpop.f32.mrf.mxu0
        %v1462 = vadd.f32 0.0, %v1461
        %1463 = vmatmul.bf16.gmra.mxu0 %v1402
        %v1464 = vpop.f32.mrf.mxu0
        %v1465 = vadd.f32 0.0, %v1464
        %v1466 = vpop.f32.mrf.mxu0
        %v1467 = vadd.f32 0.0, %v1466
        %1468 = vmatmul.bf16.gmra.mxu0 %v1405
        %v1469 = vpop.f32.mrf.mxu0
        %v1470 = vadd.f32 0.0, %v1469
        %v1471 = vpop.f32.mrf.mxu0
        %v1472 = vadd.f32 0.0, %v1471
        %1473 = vmatmul.bf16.gmra.mxu0 %v1408
        %v1474 = vpop.f32.mrf.mxu0
        %v1475 = vadd.f32 0.0, %v1474
        %v1476 = vpop.f32.mrf.mxu0
        %v1477 = vadd.f32 0.0, %v1476
        %1478 = vmatmul.bf16.gmra.mxu0 %v1411
        %v1479 = vpop.f32.mrf.mxu0
        %v1480 = vadd.f32 0.0, %v1479
        %v1481 = vpop.f32.mrf.mxu0
        %v1482 = vadd.f32 0.0, %v1481
        %1483 = vmatmul.bf16.gmra.mxu0 %v1414
        %v1484 = vpop.f32.mrf.mxu0
        %v1485 = vadd.f32 0.0, %v1484
        %v1486 = vpop.f32.mrf.mxu0
        %v1487 = vadd.f32 0.0, %v1486
        %1488 = vmatmul.bf16.gmra.mxu0 %v1417
        %v1489 = vpop.f32.mrf.mxu0
        %v1490 = vadd.f32 0.0, %v1489
        %v1491 = vpop.f32.mrf.mxu0
        %v1492 = vadd.f32 0.0, %v1491
        %1493 = vmatmul.bf16.gmra.mxu0 %v1420
        %v1494 = vpop.f32.mrf.mxu0
        %v1495 = vadd.f32 0.0, %v1494
        %v1496 = vpop.f32.mrf.mxu0
        %v1497 = vadd.f32 0.0, %v1496
        %1498 = vmatmul.bf16.gmra.mxu0 %v1423
        %v1499 = vpop.f32.mrf.mxu0
        %v1500 = vadd.f32 0.0, %v1499
        %v1501 = vpop.f32.mrf.mxu0
        %v1502 = vadd.f32 0.0, %v1501
        %1503 = vmatmul.bf16.gmra.mxu0 %v1426
        %v1504 = vpop.f32.mrf.mxu0
        %v1505 = vadd.f32 0.0, %v1504
        %v1506 = vpop.f32.mrf.mxu0
        %v1507 = vadd.f32 0.0, %v1506
        %1508 = vmatmul.bf16.gmra.mxu0 %v1429
        %v1509 = vpop.f32.mrf.mxu0
        %v1510 = vadd.f32 0.0, %v1509
        %v1511 = vpop.f32.mrf.mxu0
        %v1512 = vadd.f32 0.0, %v1511
        %1513 = vmatmul.bf16.gmra.mxu0 %v1432
        %v1514 = vpop.f32.mrf.mxu0
        %v1515 = vadd.f32 0.0, %v1514
        %v1516 = vpop.f32.mrf.mxu0
        %v1517 = vadd.f32 0.0, %v1516
        %1518 = vmatmul.bf16.gmra.mxu0 %v1435
        %v1519 = vpop.f32.mrf.mxu0
        %v1520 = vadd.f32 0.0, %v1519
        %v1521 = vpop.f32.mrf.mxu0
        %v1522 = vadd.f32 0.0, %v1521
        %1523 = vmatmul.bf16.gmra.mxu0 %v1438
        %v1524 = vpop.f32.mrf.mxu0
        %v1525 = vadd.f32 0.0, %v1524
        %v1526 = vpop.f32.mrf.mxu0
        %v1527 = vadd.f32 0.0, %v1526
        %1528 = vdwg.mxu0
        %1529 = vst [vmem:[%s304] sm:$0xff] %v1450
        %1530 = vst [vmem:[%s304 + $0x8] sm:$0xff] %v1452
        %1531 = vst [vmem:[%s304 + $0x10] sm:$0xff] %v1455
        %1532 = vst [vmem:[%s304 + $0x18] sm:$0xff] %v1457
        %1533 = vst [vmem:[%s304 + $0x20] sm:$0xff] %v1460
        %1534 = vst [vmem:[%s304 + $0x28] sm:$0xff] %v1462
        %1535 = vst [vmem:[%s304 + $0x30] sm:$0xff] %v1465
        %1536 = vst [vmem:[%s304 + $0x38] sm:$0xff] %v1467
        %1537 = vst [vmem:[%s304 + $0x40] sm:$0xff] %v1470
        %1538 = vst [vmem:[%s304 + $0x48] sm:$0xff] %v1472
        %1539 = vst [vmem:[%s304 + $0x50] sm:$0xff] %v1475
        %1540 = vst [vmem:[%s304 + $0x58] sm:$0xff] %v1477
        %1541 = vst [vmem:[%s304 + $0x60] sm:$0xff] %v1480
        %1542 = vst [vmem:[%s304 + $0x68] sm:$0xff] %v1482
        %1543 = vst [vmem:[%s304 + $0x70] sm:$0xff] %v1485
        %1544 = vst [vmem:[%s304 + $0x78] sm:$0xff] %v1487
        %1545 = vst [vmem:[%s304 + $0x80] sm:$0xff] %v1490
        %1546 = vst [vmem:[%s304 + $0x88] sm:$0xff] %v1492
        %1547 = vst [vmem:[%s304 + $0x90] sm:$0xff] %v1495
        %1548 = vst [vmem:[%s304 + $0x98] sm:$0xff] %v1497
        %1549 = vst [vmem:[%s304 + $0xa0] sm:$0xff] %v1500
        %1550 = vst [vmem:[%s304 + $0xa8] sm:$0xff] %v1502
        %1551 = vst [vmem:[%s304 + $0xb0] sm:$0xff] %v1505
        %1552 = vst [vmem:[%s304 + $0xb8] sm:$0xff] %v1507
        %1553 = vst [vmem:[%s304 + $0xc0] sm:$0xff] %v1510
        %1554 = vst [vmem:[%s304 + $0xc8] sm:$0xff] %v1512
        %1555 = vst [vmem:[%s304 + $0xd0] sm:$0xff] %v1515
        %1556 = vst [vmem:[%s304 + $0xd8] sm:$0xff] %v1517
        %1557 = vst [vmem:[%s304 + $0xe0] sm:$0xff] %v1520
        %1558 = vst [vmem:[%s304 + $0xe8] sm:$0xff] %v1522
        %1559 = vst [vmem:[%s304 + $0xf0] sm:$0xff] %v1525
        %1560 = vst [vmem:[%s304 + $0xf8] sm:$0xff] %v1527
        %s1561 = sand.u32 %s163, 1
        %s1562 = scalar_lea.sflag [#allocation4], %s1561
        %s1563 = sand.u32 %s163, 1
        %s1564 = smul.addr %s1563, 256
        %s1565 = scalar_lea.vmem [#allocation8], %s1564
        // Predicated region
        $region57: #{separable_conv2d.1} parent=43 // pred_check
          %p1566 = pneg %p173
        $region58: #{separable_conv2d.1} parent=43 // pred_check_branch
          %1568 = sbr.rel (%p1566) target = $region60
        $region59: #{separable_conv2d.1} parent=43 // pred_region
          %1570 = vsyncadd %s1562, 0
          %s1571 = smul.addr %s24, 32
          %s1572 = smul.addr %s1571, 8
          %s1573 = scalar_lea.hbm %s6, %s1572
          %s1574 = sshll.u32 %s1565, 4
          %s1575 = int_to_ptr.vmem [resolvable:$true] %s1574
          %s1576 = sshll.u32 %s1573, 4
          %s1577 = int_to_ptr.hbm [resolvable:$true] %s1576
          %1582 = dma.vmem_to_hbm [thread:$0]  %s1575, 4096, %s1577, %s1562, 128, 128, 8
        $region60: #{separable_conv2d.1} parent=43 // pred_fallthru
          _
      $region44: #{separable_conv2d.1} parent=5 // pred_fallthru
        _
      %p1583 = scmp.le.s32.totalorder 2, %s19
      // Predicated region
      $region61: #{separable_conv2d.1} parent=5 // pred_check
        %p1584 = pneg %p1583
      $region62: #{separable_conv2d.1} parent=5 // pred_check_branch
        %1586 = sbr.rel (%p1584) target = $region64
      $region63: #{separable_conv2d.1} parent=5 // pred_region
        %s1587 = ssub.s32 %s19, 2
        // Predicated region
        $region65: #{separable_conv2d.1} parent=63 // pred_check
          %p1588 = pneg %p179
        $region66: #{separable_conv2d.1} parent=63 // pred_check_branch
          %1590 = sbr.rel (%p1588) target = $region68
        $region67: #{separable_conv2d.1} parent=63 // pred_region
          %s1591 = sand.u32 %s164, 1
          %s1592 = scalar_lea.sflag [#allocation4], %s1591
          %s1593 = sand.u32 %s164, 1
          %s1594 = smul.addr %s1593, 256
          %s1595 = scalar_lea.vmem [#allocation8], %s1594
          %1597 = dma.done %s1592, 4096
        $region68: #{separable_conv2d.1} parent=63 // pred_fallthru
          _
      $region64: #{separable_conv2d.1} parent=5 // pred_fallthru
        _
    $region6: #{separable_conv2d.1} parent=1 // loop_footer
      %s23 = sadd.s32 1, %s19
    $region7: #{separable_conv2d.1} parent=1 // loop_footer_branch
      %18 = sbr.rel target = $region3
    $region8: #{separable_conv2d.1} parent=1 // loop_exit
      _
    %1598 = vsyncpa [#allocation3], 1
    %s1599 = scalar_lea.sflag [#allocation3], 1
    %1600 = vsyncpa %s1599, 1
    %1601 = vsyncpa [#allocation6], 1
    %1602 = vsyncpa [#allocation4], 1
    %s1603 = scalar_lea.sflag [#allocation4], 1
    %1604 = vsyncpa %s1603, 1

</llo_original>
